<compile_context>
chip_gen: v7x
topology: tpu7x:2x2x1
jax: 0.10.0
libtpu: 0.0.40
codegen_flags: <defaults>
</compile_context>

<pallas_src>
import jax
import jax.numpy as jnp
from jax import lax
from jax.experimental import pallas as pl
from jax.experimental.pallas import tpu as pltpu

NUM_EMBED = 22   # fixed by nn.Embedding(22, 32)
EMB_DIM = 32
LANE = 128
SUBLANE = 8


def _round_up(n, m):
    return pl.cdiv(n, m) * m


def policy_kernel(x_ref, fw_ref, w2_ref, out_ref):
    idx = x_ref[...]                     # (bb, L) int32 token indices
    bb, L = idx.shape
    kp = fw_ref.shape[0]                 # padded K (>= L*22 + 1)
    bias_col = L * NUM_EMBED             # constant-1 column selecting the b1 row

    # Positional one-hot built directly in its final (bb, Kp) layout:
    #   onehot[b, l*22 + idx[b, l]] = 1, onehot[b, bias_col] = 1, else 0.
    # Unrolled 2-D compare/select chain: no 3-D intermediates, no reduction,
    # f32 produced exactly once.  (Out-of-range / negative indices silently give
    # a zero or wrong fused row instead of raising like nn.Embedding -- benign
    # for validated inputs.)
    col = lax.broadcasted_iota(jnp.int32, (bb, kp), 1)
    onehot = jnp.where(col == bias_col, 1.0, 0.0).astype(jnp.float32)
    for l in range(L):
        tgt = idx[:, l:l + 1] + NUM_EMBED * l            # (bb, 1)
        onehot = jnp.where(col == tgt, 1.0, onehot)

    # (Embedding -> Flatten -> Linear1 + b1) as ONE MXU matmul, then ReLU.
    # Column H of fw is a constant-1 pass-through that carries b2 through ReLU.
    h = jnp.maximum(
        jnp.dot(onehot, fw_ref[...], preferred_element_type=jnp.float32), 0.0)

    # Linear2 (+ b2 via the appended row of w2) -> Sigmoid (EUP).
    logits = jnp.dot(h, w2_ref[...], preferred_element_type=jnp.float32)
    out_ref[...] = jax.nn.sigmoid(logits)


def _prepare_weights(emb, w1, b1, w2, b2, seq_len):
    """One-time, weight-static fusion of Embedding+Linear1, bias folding, and
    zero-padding to lane/sublane-aligned shapes."""
    H = w1.shape[1]
    O = w2.shape[1]
    k_true = seq_len * NUM_EMBED + 1          # +1 bias column
    kp = _round_up(k_true, LANE)              # 256 for seq_len=8
    np_ = _round_up(H + 1, LANE)              # 128 for H=32 (+1 pass-through col)
    op = _round_up(O, LANE)                   # 128 for O=16 (lane-dense output)

    # fused[l*22 + v, :] = emb[v, :] @ w1[l*EMB_DIM:(l+1)*EMB_DIM, :]
    w1_r = w1.astype(jnp.float32).reshape(seq_len, EMB_DIM, H)
    fused = jnp.einsum('ve,leh->lvh', emb.astype(jnp.float32), w1_r,
                       precision=lax.Precision.HIGHEST
                       ).reshape(seq_len * NUM_EMBED, H)

    fw = jnp.zeros((kp, np_), jnp.float32)
    fw = fw.at[:seq_len * NUM_EMBED, :H].set(fused)
    fw = fw.at[seq_len * NUM_EMBED, :H].set(b1.reshape(H).astype(jnp.float32))
    fw = fw.at[seq_len * NUM_EMBED, H].set(1.0)     # -> h[:, H] == 1 after ReLU

    w2p = jnp.zeros((np_, op), jnp.float32)
    w2p = w2p.at[:H, :O].set(w2.astype(jnp.float32))
    w2p = w2p.at[H, :O].set(b2.reshape(O).astype(jnp.float32))   # b2 via pass-through
    return fw, w2p


def make_policy_forward(emb, w1, b1, w2, b2, *, max_block_rows=256):
    """Build the forward fn once: fused/padded weights are computed here (not per
    call) and closed over by a jitted wrapper around the Pallas kernel."""
    seq_len = w1.shape[0] // EMB_DIM
    out_dim = w2.shape[1]
    fw, w2p = _prepare_weights(emb, w1, b1, w2, b2, seq_len)
    fw = jax.block_until_ready(fw)        # one-time prep, off the per-call path
    w2p = jax.block_until_ready(w2p)
    kp, np_ = fw.shape
    op = w2p.shape[1]

    @jax.jit
    def forward(x):
        batch = x.shape[0]
        # Sublane-aligned row blocks; <=max_block_rows keeps per-block one-hot
        # intermediates tiny (v7x: well under the 32 MiB scoped VMEM default),
        # and the "parallel" batch axis shards big batches across v7x's 2 TCs.
        bb = min(_round_up(batch, SUBLANE), max_block_rows)
        bp = _round_up(batch, bb)
        x_p = x if bp == batch else jnp.pad(x, ((0, bp - batch), (0, 0)))
        out = pl.pallas_call(
            policy_kernel,
            out_shape=jax.ShapeDtypeStruct((bp, op), jnp.float32),
            grid=(bp // bb,),
            in_specs=[
                pl.BlockSpec((bb, seq_len), lambda i: (i, 0)),   # token ids
                pl.BlockSpec((kp, np_), lambda i: (0, 0)),       # fused W1 (whole)
                pl.BlockSpec((np_, op), lambda i: (0, 0)),       # W2 (whole)
            ],
            out_specs=pl.BlockSpec((bb, op), lambda i: (i, 0)),
            compiler_params=pltpu.CompilerParams(
                dimension_semantics=("parallel",)),
        )(x_p, fw, w2p)
        return out[:batch, :out_dim]      # drop row padding / lane-padding cols

    return forward


if __name__ == "__main__":
    # Keep the non-Pallas reference matmuls in full f32 so the comparison is tight.
    jax.config.update("jax_default_matmul_precision", "highest")

    # Small shapes consistent with the module's forward:
    # batch=2, seq(input_size)=8, embed=32 (fixed by the module), hidden=32, output=16.
    B, L, H, O = 2, 8, 32, 16

    key = jax.random.PRNGKey(0)
    k1, k2, k3, k4, k5, k6 = jax.random.split(key, 6)
    x = jax.random.randint(k1, (B, L), 0, NUM_EMBED, dtype=jnp.int32)
    emb = jax.random.normal(k2, (NUM_EMBED, EMB_DIM), jnp.float32)
    # PyTorch Linear is y = x @ W.T + b; weights stored pre-transposed: (in, out).
    w1 = jax.random.normal(k3, (L * EMB_DIM, H), jnp.float32) * 0.05
    b1 = jax.random.normal(k4, (1, H), jnp.float32) * 0.05
    w2 = jax.random.normal(k5, (H, O), jnp.float32) * 0.05
    b2 = jax.random.normal(k6, (1, O), jnp.float32) * 0.05

    forward = make_policy_forward(emb, w1, b1, w2, b2)
    out = jax.block_until_ready(forward(x))

    # Pure-JAX reference (unfused) for correctness.
    ref = jax.nn.sigmoid(
        jnp.maximum(jnp.take(emb, x, axis=0).reshape(B, -1) @ w1 + b1, 0.0) @ w2 + b2)
    assert out.shape == (B, O) and out.dtype == jnp.float32
    # The emb@w1 pre-fusion re-associates the reduction -> tiny rounding delta.
    assert jnp.allclose(out, ref, atol=1e-4, rtol=1e-4)
    print("KERNEL_OK")
</pallas_src>

<mosaic_0001>
module attributes {stable_mosaic.version = 11 : i64} {
  func.func @policy_kernel(%arg0: i32, %arg1: memref<8x8xi32, #tpu.memory_space<vmem>>, %arg2: memref<256x128xf32, #tpu.memory_space<vmem>>, %arg3: memref<128x128xf32, #tpu.memory_space<vmem>>, %arg4: memref<8x128xf32, #tpu.memory_space<vmem>>) attributes {dimension_semantics = [#tpu.dimension_semantics<parallel>], iteration_bounds = array<i64: 1>, scalar_prefetch = 0 : i64, scratch_operands = 0 : i64, tpu.core_type = #tpu.core_type<tc>, window_params = [{transform_indices = @transform_0, window_bounds = array<i64: 8, 8>}, {pipeline_mode = #tpu.pipeline_mode<synchronous>, transform_indices = @transform_1, window_bounds = array<i64: 256, 128>}, {pipeline_mode = #tpu.pipeline_mode<synchronous>, transform_indices = @transform_2, window_bounds = array<i64: 128, 128>}, {transform_indices = @transform_3, window_bounds = array<i64: 8, 128>}]} {
    %c0 = arith.constant 0 : index
    %c0_0 = arith.constant 0 : index
    %0 = vector.load %arg1[%c0, %c0_0] : memref<8x8xi32, #tpu.memory_space<vmem>>, vector<8x8xi32>
    %1 = tpu.iota {dimensions = array<i32: 1>} : vector<8x256xi32>
    %c176_i32 = arith.constant 176 : i32
    %2 = vector.broadcast %c176_i32 : i32 to vector<8x256xi32>
    %3 = arith.cmpi eq, %1, %2 : vector<8x256xi32>
    %cst = arith.constant 1.000000e+00 : f32
    %cst_1 = arith.constant 0.000000e+00 : f32
    %4 = vector.broadcast %cst : f32 to vector<8x256xf32>
    %5 = vector.broadcast %cst_1 : f32 to vector<8x256xf32>
    %6 = arith.select %3, %4, %5 : vector<8x256xi1>, vector<8x256xf32>
    %7 = vector.extract_strided_slice %0 {offsets = [0, 0], sizes = [8, 1], strides = [1, 1]} : vector<8x8xi32> to vector<8x1xi32>
    %c0_i32 = arith.constant 0 : i32
    %8 = vector.broadcast %c0_i32 : i32 to vector<8x1xi32>
    %9 = arith.addi %7, %8 : vector<8x1xi32>
    %10 = vector.broadcast %9 : vector<8x1xi32> to vector<8x256xi32>
    %11 = arith.cmpi eq, %1, %10 : vector<8x256xi32>
    %cst_2 = arith.constant 1.000000e+00 : f32
    %12 = vector.broadcast %cst_2 : f32 to vector<8x256xf32>
    %13 = arith.select %11, %12, %6 : vector<8x256xi1>, vector<8x256xf32>
    %14 = vector.extract_strided_slice %0 {offsets = [0, 1], sizes = [8, 1], strides = [1, 1]} : vector<8x8xi32> to vector<8x1xi32>
    %c22_i32 = arith.constant 22 : i32
    %15 = vector.broadcast %c22_i32 : i32 to vector<8x1xi32>
    %16 = arith.addi %14, %15 : vector<8x1xi32>
    %17 = vector.broadcast %16 : vector<8x1xi32> to vector<8x256xi32>
    %18 = arith.cmpi eq, %1, %17 : vector<8x256xi32>
    %cst_3 = arith.constant 1.000000e+00 : f32
    %19 = vector.broadcast %cst_3 : f32 to vector<8x256xf32>
    %20 = arith.select %18, %19, %13 : vector<8x256xi1>, vector<8x256xf32>
    %21 = vector.extract_strided_slice %0 {offsets = [0, 2], sizes = [8, 1], strides = [1, 1]} : vector<8x8xi32> to vector<8x1xi32>
    %c44_i32 = arith.constant 44 : i32
    %22 = vector.broadcast %c44_i32 : i32 to vector<8x1xi32>
    %23 = arith.addi %21, %22 : vector<8x1xi32>
    %24 = vector.broadcast %23 : vector<8x1xi32> to vector<8x256xi32>
    %25 = arith.cmpi eq, %1, %24 : vector<8x256xi32>
    %cst_4 = arith.constant 1.000000e+00 : f32
    %26 = vector.broadcast %cst_4 : f32 to vector<8x256xf32>
    %27 = arith.select %25, %26, %20 : vector<8x256xi1>, vector<8x256xf32>
    %28 = vector.extract_strided_slice %0 {offsets = [0, 3], sizes = [8, 1], strides = [1, 1]} : vector<8x8xi32> to vector<8x1xi32>
    %c66_i32 = arith.constant 66 : i32
    %29 = vector.broadcast %c66_i32 : i32 to vector<8x1xi32>
    %30 = arith.addi %28, %29 : vector<8x1xi32>
    %31 = vector.broadcast %30 : vector<8x1xi32> to vector<8x256xi32>
    %32 = arith.cmpi eq, %1, %31 : vector<8x256xi32>
    %cst_5 = arith.constant 1.000000e+00 : f32
    %33 = vector.broadcast %cst_5 : f32 to vector<8x256xf32>
    %34 = arith.select %32, %33, %27 : vector<8x256xi1>, vector<8x256xf32>
    %35 = vector.extract_strided_slice %0 {offsets = [0, 4], sizes = [8, 1], strides = [1, 1]} : vector<8x8xi32> to vector<8x1xi32>
    %c88_i32 = arith.constant 88 : i32
    %36 = vector.broadcast %c88_i32 : i32 to vector<8x1xi32>
    %37 = arith.addi %35, %36 : vector<8x1xi32>
    %38 = vector.broadcast %37 : vector<8x1xi32> to vector<8x256xi32>
    %39 = arith.cmpi eq, %1, %38 : vector<8x256xi32>
    %cst_6 = arith.constant 1.000000e+00 : f32
    %40 = vector.broadcast %cst_6 : f32 to vector<8x256xf32>
    %41 = arith.select %39, %40, %34 : vector<8x256xi1>, vector<8x256xf32>
    %42 = vector.extract_strided_slice %0 {offsets = [0, 5], sizes = [8, 1], strides = [1, 1]} : vector<8x8xi32> to vector<8x1xi32>
    %c110_i32 = arith.constant 110 : i32
    %43 = vector.broadcast %c110_i32 : i32 to vector<8x1xi32>
    %44 = arith.addi %42, %43 : vector<8x1xi32>
    %45 = vector.broadcast %44 : vector<8x1xi32> to vector<8x256xi32>
    %46 = arith.cmpi eq, %1, %45 : vector<8x256xi32>
    %cst_7 = arith.constant 1.000000e+00 : f32
    %47 = vector.broadcast %cst_7 : f32 to vector<8x256xf32>
    %48 = arith.select %46, %47, %41 : vector<8x256xi1>, vector<8x256xf32>
    %49 = vector.extract_strided_slice %0 {offsets = [0, 6], sizes = [8, 1], strides = [1, 1]} : vector<8x8xi32> to vector<8x1xi32>
    %c132_i32 = arith.constant 132 : i32
    %50 = vector.broadcast %c132_i32 : i32 to vector<8x1xi32>
    %51 = arith.addi %49, %50 : vector<8x1xi32>
    %52 = vector.broadcast %51 : vector<8x1xi32> to vector<8x256xi32>
    %53 = arith.cmpi eq, %1, %52 : vector<8x256xi32>
    %cst_8 = arith.constant 1.000000e+00 : f32
    %54 = vector.broadcast %cst_8 : f32 to vector<8x256xf32>
    %55 = arith.select %53, %54, %48 : vector<8x256xi1>, vector<8x256xf32>
    %56 = vector.extract_strided_slice %0 {offsets = [0, 7], sizes = [8, 1], strides = [1, 1]} : vector<8x8xi32> to vector<8x1xi32>
    %c154_i32 = arith.constant 154 : i32
    %57 = vector.broadcast %c154_i32 : i32 to vector<8x1xi32>
    %58 = arith.addi %56, %57 : vector<8x1xi32>
    %59 = vector.broadcast %58 : vector<8x1xi32> to vector<8x256xi32>
    %60 = arith.cmpi eq, %1, %59 : vector<8x256xi32>
    %cst_9 = arith.constant 1.000000e+00 : f32
    %61 = vector.broadcast %cst_9 : f32 to vector<8x256xf32>
    %62 = arith.select %60, %61, %55 : vector<8x256xi1>, vector<8x256xf32>
    %c0_10 = arith.constant 0 : index
    %c0_11 = arith.constant 0 : index
    %63 = vector.load %arg2[%c0_10, %c0_11] : memref<256x128xf32, #tpu.memory_space<vmem>>, vector<256x128xf32>
    %cst_12 = arith.constant dense<0.000000e+00> : vector<8x128xf32>
    %64 = tpu.matmul %62, %63, %cst_12 {dimension_numbers = #tpu.dot_dimension_numbers<[1], [0], [0], [1], [0, 0, 1, 1], [], []>, precision = #tpu.contract_precision<fp32>} : vector<8x256xf32>, vector<256x128xf32>, vector<8x128xf32> -> vector<8x128xf32>
    %cst_13 = arith.constant 0.000000e+00 : f32
    %65 = vector.broadcast %cst_13 : f32 to vector<8x128xf32>
    %66 = arith.maximumf %64, %65 : vector<8x128xf32>
    %c0_14 = arith.constant 0 : index
    %c0_15 = arith.constant 0 : index
    %67 = vector.load %arg3[%c0_14, %c0_15] : memref<128x128xf32, #tpu.memory_space<vmem>>, vector<128x128xf32>
    %cst_16 = arith.constant dense<0.000000e+00> : vector<8x128xf32>
    %68 = tpu.matmul %66, %67, %cst_16 {dimension_numbers = #tpu.dot_dimension_numbers<[1], [0], [0], [1], [0, 0, 1, 1], [], []>, precision = #tpu.contract_precision<fp32>} : vector<8x128xf32>, vector<128x128xf32>, vector<8x128xf32> -> vector<8x128xf32>
    %69 = arith.negf %68 : vector<8x128xf32>
    %70 = math.exp %69 : vector<8x128xf32>
    %cst_17 = arith.constant 1.000000e+00 : f32
    %71 = vector.broadcast %cst_17 : f32 to vector<8x128xf32>
    %72 = arith.addf %71, %70 : vector<8x128xf32>
    %73 = arith.divf %71, %72 : vector<8x128xf32>
    %c0_18 = arith.constant 0 : index
    %c0_19 = arith.constant 0 : index
    %74 = vector.load %arg4[%c0_18, %c0_19] : memref<8x128xf32, #tpu.memory_space<vmem>>, vector<8x128xf32>
    tpu.vector_store %arg4[%c0_18, %c0_19], %73 {strides = array<i32>} : memref<8x128xf32, #tpu.memory_space<vmem>>, vector<8x128xf32>,
    return
  }
  func.func @transform_0(%arg0: i32) -> (i32, i32) {
    %c0_i32 = arith.constant 0 : i32
    %c0_i32_0 = arith.constant 0 : i32
    return %arg0, %c0_i32 : i32, i32
  }
  func.func @transform_1(%arg0: i32) -> (i32, i32) {
    %c0_i32 = arith.constant 0 : i32
    %c0_i32_0 = arith.constant 0 : i32
    %c0_i32_1 = arith.constant 0 : i32
    return %c0_i32, %c0_i32_0 : i32, i32
  }
  func.func @transform_2(%arg0: i32) -> (i32, i32) {
    %c0_i32 = arith.constant 0 : i32
    %c0_i32_0 = arith.constant 0 : i32
    %c0_i32_1 = arith.constant 0 : i32
    return %c0_i32, %c0_i32_0 : i32, i32
  }
  func.func @transform_3(%arg0: i32) -> (i32, i32) {
    %c0_i32 = arith.constant 0 : i32
    %c0_i32_0 = arith.constant 0 : i32
    return %arg0, %c0_i32 : i32, i32
  }
}

</mosaic_0001>

<llo_original>
// kernel: forward.1
$region0: #{forward.1}
  #allocation0 [shape = 'u32[]', space=smem, size = 0x4, offset = 0x4, fixed_abs, tag = 'smem constant byte address 0x4 - core index']
  #allocation1 [shape = 'u32[144,128]{1,0:T(1,128)}', space=vmem, size = 0x12000, scoped, tag = 'internal scratch']
  %s0 = inlined_call_operand.vmem [shape: s32[8,8], index: 0, kind: input, shape index: {}]
  %s1 = inlined_call_operand.hbm [shape: f32[256,128], index: 1, kind: input, shape index: {}]
  %s2 = inlined_call_operand.hbm [shape: f32[128,128], index: 2, kind: input, shape index: {}]
  %s3 = inlined_call_operand.vmem [shape: f32[8,128], index: 3, kind: output, shape index: {}]
  %s4 = sld [smem:[#allocation0]]
  $region30: #{forward.1} parent=0
    _
  %s6 = ssub.s32 1, %s4
  %s7 = scalar_select 0, %s6, %s4
  $region1: #{forward.1} parent=0
    #allocation2 [shape = 'u8[131072]{0}', space=vmem, size = 0x20000, scoped, tag = 'input window, operand 1, single buffered']
    #allocation3 [shape = 's32[1]{0}', space=sflag, size = 0x4, scoped, tag = 'scoped memory for forward.1']
    #allocation4 [shape = 'u8[65536]{0}', space=vmem, size = 0x10000, scoped, tag = 'input window, operand 2, single buffered']
    #allocation5 [shape = 's32[1]{0}', space=sflag, size = 0x4, scoped, tag = 'scoped memory for forward.1']
    %8 = vsyncpa [#allocation3], 0
    %9 = vsyncpa [#allocation5], 0
    // Predicated region
    $region2: #{forward.1} parent=1 // pred_check
      _
    $region3: #{forward.1} parent=1 // pred_check_branch
      %11 = sbr.rel (0) target = $region5
    $region4: #{forward.1} parent=1 // pred_region
      _
    $region5: #{forward.1} parent=1 // pred_fallthru
      _
    // Predicated region
    $region6: #{forward.1} parent=1 // pred_check
      _
    $region7: #{forward.1} parent=1 // pred_check_branch
      %13 = sbr.rel (0) target = $region9
    $region8: #{forward.1} parent=1 // pred_region
      %s15 = ssub.s32 4096, 4096
      %16 = vsyncadd [#allocation3], %s15
      %s17 = sshll.u32 [#allocation2], 4
      %s18 = int_to_ptr.vmem [resolvable:$true] %s17
      %23 = dma.hbm_to_vmem [thread:$0]  %s1, 4096, %s18, [#allocation3], 128, 128, 8
    $region9: #{forward.1} parent=1 // pred_fallthru
      _
    // Predicated region
    $region10: #{forward.1} parent=1 // pred_check
      _
    $region11: #{forward.1} parent=1 // pred_check_branch
      %25 = sbr.rel (0) target = $region13
    $region12: #{forward.1} parent=1 // pred_region
      %s27 = ssub.s32 2048, 2048
      %28 = vsyncadd [#allocation5], %s27
      %s29 = sshll.u32 [#allocation4], 4
      %s30 = int_to_ptr.vmem [resolvable:$true] %s29
      %35 = dma.hbm_to_vmem [thread:$0]  %s2, 2048, %s30, [#allocation5], 128, 128, 8
    $region13: #{forward.1} parent=1 // pred_fallthru
      _
    // Predicated region
    $region14: #{forward.1} parent=1 // pred_check
      _
    $region15: #{forward.1} parent=1 // pred_check_branch
      %37 = sbr.rel (0) target = $region17
    $region16: #{forward.1} parent=1 // pred_region
      %38 = dma.done [#allocation3], 4096
    $region17: #{forward.1} parent=1 // pred_fallthru
      _
    // Predicated region
    $region18: #{forward.1} parent=1 // pred_check
      _
    $region19: #{forward.1} parent=1 // pred_check_branch
      %40 = sbr.rel (0) target = $region21
    $region20: #{forward.1} parent=1 // pred_region
      %41 = dma.done [#allocation5], 2048
    $region21: #{forward.1} parent=1 // pred_fallthru
      _
    %v42 = vld [vmem:[%s0] sm:$0xff]
    %v43 = vlaneseq
    %v44 = vand.u32 %v43, 127
    %v45 = vadd.s32 %v44, 128
    %vm46 = vcmp.eq.s32.totalorder %v44, 176
    %vm47 = vcmp.eq.s32.totalorder %v45, 176
    %v48 = vsel %vm46, 1.0, 0.0
    %v49 = vsel %vm47, 1.0, 0.0
    %50 = vset.pattern.permute.xlu0 0
    %51 = vperm.xlu0 %50, %v42
    %v52 = vpop.permute.xlu0 %51
    %vm53 = vcmp.eq.s32.totalorder %v44, %v52
    %vm54 = vcmp.eq.s32.totalorder %v45, %v52
    %v55 = vsel %vm53, 1.0, %v48
    %v56 = vsel %vm54, 1.0, %v49
    %v57 = vadd.s32 %v42, 22
    %58 = vset.pattern.permute.xlu0 1
    %59 = vperm.xlu0 %58, %v57
    %v60 = vpop.permute.xlu0 %59
    %vm61 = vcmp.eq.s32.totalorder %v44, %v60
    %vm62 = vcmp.eq.s32.totalorder %v45, %v60
    %v63 = vsel %vm61, 1.0, %v55
    %v64 = vsel %vm62, 1.0, %v56
    %v65 = vadd.s32 %v42, 44
    %66 = vset.pattern.permute.xlu0 2
    %67 = vperm.xlu0 %66, %v65
    %v68 = vpop.permute.xlu0 %67
    %vm69 = vcmp.eq.s32.totalorder %v44, %v68
    %vm70 = vcmp.eq.s32.totalorder %v45, %v68
    %v71 = vsel %vm69, 1.0, %v63
    %v72 = vsel %vm70, 1.0, %v64
    %v73 = vadd.s32 %v42, 66
    %74 = vset.pattern.permute.xlu0 3
    %75 = vperm.xlu0 %74, %v73
    %v76 = vpop.permute.xlu0 %75
    %vm77 = vcmp.eq.s32.totalorder %v44, %v76
    %vm78 = vcmp.eq.s32.totalorder %v45, %v76
    %v79 = vsel %vm77, 1.0, %v71
    %v80 = vsel %vm78, 1.0, %v72
    %v81 = vadd.s32 %v42, 88
    %82 = vset.pattern.permute.xlu0 4
    %83 = vperm.xlu0 %82, %v81
    %v84 = vpop.permute.xlu0 %83
    %vm85 = vcmp.eq.s32.totalorder %v44, %v84
    %vm86 = vcmp.eq.s32.totalorder %v45, %v84
    %v87 = vsel %vm85, 1.0, %v79
    %v88 = vsel %vm86, 1.0, %v80
    %v89 = vadd.s32 %v42, 110
    %90 = vset.pattern.permute.xlu0 5
    %91 = vperm.xlu0 %90, %v89
    %v92 = vpop.permute.xlu0 %91
    %vm93 = vcmp.eq.s32.totalorder %v44, %v92
    %vm94 = vcmp.eq.s32.totalorder %v45, %v92
    %v95 = vsel %vm93, 1.0, %v87
    %v96 = vsel %vm94, 1.0, %v88
    %v97 = vadd.s32 %v42, 132
    %98 = vset.pattern.permute.xlu0 6
    %99 = vperm.xlu0 %98, %v97
    %v100 = vpop.permute.xlu0 %99
    %vm101 = vcmp.eq.s32.totalorder %v44, %v100
    %vm102 = vcmp.eq.s32.totalorder %v45, %v100
    %v103 = vsel %vm101, 1.0, %v95
    %v104 = vsel %vm102, 1.0, %v96
    %v105 = vadd.s32 %v42, 154
    %106 = vset.pattern.permute.xlu0 7
    %107 = vperm.xlu0 %106, %v105
    %v108 = vpop.permute.xlu0 %107
    %vm109 = vcmp.eq.s32.totalorder %v44, %v108
    %vm110 = vcmp.eq.s32.totalorder %v45, %v108
    %v111 = vsel %vm109, 1.0, %v103
    %v112 = vsel %vm110, 1.0, %v104
    %v113 = vld [vmem:[#allocation2] sm:$0xff]
    %v114 = vld [vmem:[#allocation2 + $0x8] sm:$0xff]
    %v115 = vld [vmem:[#allocation2 + $0x10] sm:$0xff]
    %v116 = vld [vmem:[#allocation2 + $0x18] sm:$0xff]
    %v117 = vld [vmem:[#allocation2 + $0x20] sm:$0xff]
    %v118 = vld [vmem:[#allocation2 + $0x28] sm:$0xff]
    %v119 = vld [vmem:[#allocation2 + $0x30] sm:$0xff]
    %v120 = vld [vmem:[#allocation2 + $0x38] sm:$0xff]
    %v121 = vld [vmem:[#allocation2 + $0x40] sm:$0xff]
    %v122 = vld [vmem:[#allocation2 + $0x48] sm:$0xff]
    %v123 = vld [vmem:[#allocation2 + $0x50] sm:$0xff]
    %v124 = vld [vmem:[#allocation2 + $0x58] sm:$0xff]
    %v125 = vld [vmem:[#allocation2 + $0x60] sm:$0xff]
    %v126 = vld [vmem:[#allocation2 + $0x68] sm:$0xff]
    %v127 = vld [vmem:[#allocation2 + $0x70] sm:$0xff]
    %v128 = vld [vmem:[#allocation2 + $0x78] sm:$0xff]
    %v129 = vld [vmem:[#allocation2 + $0x80] sm:$0xff]
    %v130 = vld [vmem:[#allocation2 + $0x88] sm:$0xff]
    %v131 = vld [vmem:[#allocation2 + $0x90] sm:$0xff]
    %v132 = vld [vmem:[#allocation2 + $0x98] sm:$0xff]
    %v133 = vld [vmem:[#allocation2 + $0xa0] sm:$0xff]
    %v134 = vld [vmem:[#allocation2 + $0xa8] sm:$0xff]
    %v135 = vld [vmem:[#allocation2 + $0xb0] sm:$0xff]
    %v136 = vld [vmem:[#allocation2 + $0xb8] sm:$0xff]
    %v137 = vld [vmem:[#allocation2 + $0xc0] sm:$0xff]
    %v138 = vld [vmem:[#allocation2 + $0xc8] sm:$0xff]
    %v139 = vld [vmem:[#allocation2 + $0xd0] sm:$0xff]
    %v140 = vld [vmem:[#allocation2 + $0xd8] sm:$0xff]
    %v141 = vld [vmem:[#allocation2 + $0xe0] sm:$0xff]
    %v142 = vld [vmem:[#allocation2 + $0xe8] sm:$0xff]
    %v143 = vld [vmem:[#allocation2 + $0xf0] sm:$0xff]
    %v144 = vld [vmem:[#allocation2 + $0xf8] sm:$0xff]
    %145 = vmatprep.subr.mxu0 0.0
    %v146 = vand.u32 %v113, 4294901760
    %147 = vmatpush1.msra.mxu0 %v146
    %148 = vmatprep.subr.mxu0 0.0
    %v149 = vand.u32 %v114, 4294901760
    %150 = vmatpush1.msra.mxu0 %v149
    %151 = vmatprep.subr.mxu0 0.0
    %v152 = vand.u32 %v115, 4294901760
    %153 = vmatpush1.msra.mxu0 %v152
    %154 = vmatprep.subr.mxu0 0.0
    %v155 = vand.u32 %v116, 4294901760
    %156 = vmatpush1.msra.mxu0 %v155
    %157 = vmatprep.subr.mxu0 0.0
    %v158 = vand.u32 %v117, 4294901760
    %159 = vmatpush1.msra.mxu0 %v158
    %160 = vmatprep.subr.mxu0 0.0
    %v161 = vand.u32 %v118, 4294901760
    %162 = vmatpush1.msra.mxu0 %v161
    %163 = vmatprep.subr.mxu0 0.0
    %v164 = vand.u32 %v119, 4294901760
    %165 = vmatpush1.msra.mxu0 %v164
    %166 = vmatprep.subr.mxu0 0.0
    %v167 = vand.u32 %v120, 4294901760
    %168 = vmatpush1.msra.mxu0 %v167
    %169 = vmatprep.subr.mxu0 0.0
    %v170 = vand.u32 %v121, 4294901760
    %171 = vmatpush1.msra.mxu0 %v170
    %172 = vmatprep.subr.mxu0 0.0
    %v173 = vand.u32 %v122, 4294901760
    %174 = vmatpush1.msra.mxu0 %v173
    %175 = vmatprep.subr.mxu0 0.0
    %v176 = vand.u32 %v123, 4294901760
    %177 = vmatpush1.msra.mxu0 %v176
    %178 = vmatprep.subr.mxu0 0.0
    %v179 = vand.u32 %v124, 4294901760
    %180 = vmatpush1.msra.mxu0 %v179
    %181 = vmatprep.subr.mxu0 0.0
    %v182 = vand.u32 %v125, 4294901760
    %183 = vmatpush1.msra.mxu0 %v182
    %184 = vmatprep.subr.mxu0 0.0
    %v185 = vand.u32 %v126, 4294901760
    %186 = vmatpush1.msra.mxu0 %v185
    %187 = vmatprep.subr.mxu0 0.0
    %v188 = vand.u32 %v127, 4294901760
    %189 = vmatpush1.msra.mxu0 %v188
    %190 = vmatprep.subr.mxu0 0.0
    %v191 = vand.u32 %v128, 4294901760
    %192 = vmatpush1.msra.mxu0 %v191
    %193 = vmatprep.subr.mxu0 0.0
    %v194 = vand.u32 %v129, 4294901760
    %195 = vmatpush1.msra.mxu0 %v194
    %196 = vmatprep.subr.mxu0 0.0
    %v197 = vand.u32 %v130, 4294901760
    %198 = vmatpush1.msra.mxu0 %v197
    %199 = vmatprep.subr.mxu0 0.0
    %v200 = vand.u32 %v131, 4294901760
    %201 = vmatpush1.msra.mxu0 %v200
    %202 = vmatprep.subr.mxu0 0.0
    %v203 = vand.u32 %v132, 4294901760
    %204 = vmatpush1.msra.mxu0 %v203
    %205 = vmatprep.subr.mxu0 0.0
    %v206 = vand.u32 %v133, 4294901760
    %207 = vmatpush1.msra.mxu0 %v206
    %208 = vmatprep.subr.mxu0 0.0
    %v209 = vand.u32 %v134, 4294901760
    %210 = vmatpush1.msra.mxu0 %v209
    %211 = vmatprep.subr.mxu0 0.0
    %v212 = vand.u32 %v135, 4294901760
    %213 = vmatpush1.msra.mxu0 %v212
    %214 = vmatprep.subr.mxu0 0.0
    %v215 = vand.u32 %v136, 4294901760
    %216 = vmatpush1.msra.mxu0 %v215
    %217 = vmatprep.subr.mxu0 0.0
    %v218 = vand.u32 %v137, 4294901760
    %219 = vmatpush1.msra.mxu0 %v218
    %220 = vmatprep.subr.mxu0 0.0
    %v221 = vand.u32 %v138, 4294901760
    %222 = vmatpush1.msra.mxu0 %v221
    %223 = vmatprep.subr.mxu0 0.0
    %v224 = vand.u32 %v139, 4294901760
    %225 = vmatpush1.msra.mxu0 %v224
    %226 = vmatprep.subr.mxu0 0.0
    %v227 = vand.u32 %v140, 4294901760
    %228 = vmatpush1.msra.mxu0 %v227
    %229 = vmatprep.subr.mxu0 0.0
    %v230 = vand.u32 %v141, 4294901760
    %231 = vmatpush1.msra.mxu0 %v230
    %232 = vmatprep.subr.mxu0 0.0
    %v233 = vand.u32 %v142, 4294901760
    %234 = vmatpush1.msra.mxu0 %v233
    %235 = vmatprep.subr.mxu0 0.0
    %v236 = vand.u32 %v143, 4294901760
    %237 = vmatpush1.msra.mxu0 %v236
    %238 = vmatprep.subr.mxu0 0.0
    %v239 = vand.u32 %v144, 4294901760
    %240 = vmatpush1.msra.mxu0 %v239
    %v241 = vand.u32 %v112, 4294901760
    %v242 = vsub.f32 %v112, %v241
    %v243 = vand.u32 %v242, 4294901760
    %v244 = vsub.f32 %v242, %v243
    %v245 = vand.u32 %v244, 4294901760
    %246 = vmatprep.mubr.f32.mxu0 %v245
    %v247 = vand.u32 %v111, 4294901760
    %v248 = vsub.f32 %v111, %v247
    %v249 = vand.u32 %v248, 4294901760
    %v250 = vsub.f32 %v248, %v249
    %v251 = vand.u32 %v250, 4294901760
    %252 = vmatmul.mubr.f32.gmra.mrb[0].mxu0 %v251
    %v253 = vpop.f32.mrb[0].mxu0
    %v254 = vadd.f32 0.0, %v253
    %v255 = vpop.f32.mrb[0].mxu0
    %256 = vdwg.mxu0
    %257 = vmatprep.subr.mxu0 0.0
    %v258 = vand.u32 %v113, 4294901760
    %v259 = vsub.f32 %v113, %v258
    %v260 = vand.u32 %v259, 4294901760
    %v261 = vsub.f32 %v259, %v260
    %v262 = vand.u32 %v261, 4294901760
    %263 = vmatpush1.msra.mxu0 %v262
    %264 = vmatprep.subr.mxu0 0.0
    %v265 = vand.u32 %v114, 4294901760
    %v266 = vsub.f32 %v114, %v265
    %v267 = vand.u32 %v266, 4294901760
    %v268 = vsub.f32 %v266, %v267
    %v269 = vand.u32 %v268, 4294901760
    %270 = vmatpush1.msra.mxu0 %v269
    %271 = vmatprep.subr.mxu0 0.0
    %v272 = vand.u32 %v115, 4294901760
    %v273 = vsub.f32 %v115, %v272
    %v274 = vand.u32 %v273, 4294901760
    %v275 = vsub.f32 %v273, %v274
    %v276 = vand.u32 %v275, 4294901760
    %277 = vmatpush1.msra.mxu0 %v276
    %278 = vmatprep.subr.mxu0 0.0
    %v279 = vand.u32 %v116, 4294901760
    %v280 = vsub.f32 %v116, %v279
    %v281 = vand.u32 %v280, 4294901760
    %v282 = vsub.f32 %v280, %v281
    %v283 = vand.u32 %v282, 4294901760
    %284 = vmatpush1.msra.mxu0 %v283
    %285 = vmatprep.subr.mxu0 0.0
    %v286 = vand.u32 %v117, 4294901760
    %v287 = vsub.f32 %v117, %v286
    %v288 = vand.u32 %v287, 4294901760
    %v289 = vsub.f32 %v287, %v288
    %v290 = vand.u32 %v289, 4294901760
    %291 = vmatpush1.msra.mxu0 %v290
    %292 = vmatprep.subr.mxu0 0.0
    %v293 = vand.u32 %v118, 4294901760
    %v294 = vsub.f32 %v118, %v293
    %v295 = vand.u32 %v294, 4294901760
    %v296 = vsub.f32 %v294, %v295
    %v297 = vand.u32 %v296, 4294901760
    %298 = vmatpush1.msra.mxu0 %v297
    %299 = vmatprep.subr.mxu0 0.0
    %v300 = vand.u32 %v119, 4294901760
    %v301 = vsub.f32 %v119, %v300
    %v302 = vand.u32 %v301, 4294901760
    %v303 = vsub.f32 %v301, %v302
    %v304 = vand.u32 %v303, 4294901760
    %305 = vmatpush1.msra.mxu0 %v304
    %306 = vmatprep.subr.mxu0 0.0
    %v307 = vand.u32 %v120, 4294901760
    %v308 = vsub.f32 %v120, %v307
    %v309 = vand.u32 %v308, 4294901760
    %v310 = vsub.f32 %v308, %v309
    %v311 = vand.u32 %v310, 4294901760
    %312 = vmatpush1.msra.mxu0 %v311
    %313 = vmatprep.subr.mxu0 0.0
    %v314 = vand.u32 %v121, 4294901760
    %v315 = vsub.f32 %v121, %v314
    %v316 = vand.u32 %v315, 4294901760
    %v317 = vsub.f32 %v315, %v316
    %v318 = vand.u32 %v317, 4294901760
    %319 = vmatpush1.msra.mxu0 %v318
    %320 = vmatprep.subr.mxu0 0.0
    %v321 = vand.u32 %v122, 4294901760
    %v322 = vsub.f32 %v122, %v321
    %v323 = vand.u32 %v322, 4294901760
    %v324 = vsub.f32 %v322, %v323
    %v325 = vand.u32 %v324, 4294901760
    %326 = vmatpush1.msra.mxu0 %v325
    %327 = vmatprep.subr.mxu0 0.0
    %v328 = vand.u32 %v123, 4294901760
    %v329 = vsub.f32 %v123, %v328
    %v330 = vand.u32 %v329, 4294901760
    %v331 = vsub.f32 %v329, %v330
    %v332 = vand.u32 %v331, 4294901760
    %333 = vmatpush1.msra.mxu0 %v332
    %334 = vmatprep.subr.mxu0 0.0
    %v335 = vand.u32 %v124, 4294901760
    %v336 = vsub.f32 %v124, %v335
    %v337 = vand.u32 %v336, 4294901760
    %v338 = vsub.f32 %v336, %v337
    %v339 = vand.u32 %v338, 4294901760
    %340 = vmatpush1.msra.mxu0 %v339
    %341 = vmatprep.subr.mxu0 0.0
    %v342 = vand.u32 %v125, 4294901760
    %v343 = vsub.f32 %v125, %v342
    %v344 = vand.u32 %v343, 4294901760
    %v345 = vsub.f32 %v343, %v344
    %v346 = vand.u32 %v345, 4294901760
    %347 = vmatpush1.msra.mxu0 %v346
    %348 = vmatprep.subr.mxu0 0.0
    %v349 = vand.u32 %v126, 4294901760
    %v350 = vsub.f32 %v126, %v349
    %v351 = vand.u32 %v350, 4294901760
    %v352 = vsub.f32 %v350, %v351
    %v353 = vand.u32 %v352, 4294901760
    %354 = vmatpush1.msra.mxu0 %v353
    %355 = vmatprep.subr.mxu0 0.0
    %v356 = vand.u32 %v127, 4294901760
    %v357 = vsub.f32 %v127, %v356
    %v358 = vand.u32 %v357, 4294901760
    %v359 = vsub.f32 %v357, %v358
    %v360 = vand.u32 %v359, 4294901760
    %361 = vmatpush1.msra.mxu0 %v360
    %362 = vmatprep.subr.mxu0 0.0
    %v363 = vand.u32 %v128, 4294901760
    %v364 = vsub.f32 %v128, %v363
    %v365 = vand.u32 %v364, 4294901760
    %v366 = vsub.f32 %v364, %v365
    %v367 = vand.u32 %v366, 4294901760
    %368 = vmatpush1.msra.mxu0 %v367
    %369 = vmatprep.subr.mxu0 0.0
    %v370 = vand.u32 %v129, 4294901760
    %v371 = vsub.f32 %v129, %v370
    %v372 = vand.u32 %v371, 4294901760
    %v373 = vsub.f32 %v371, %v372
    %v374 = vand.u32 %v373, 4294901760
    %375 = vmatpush1.msra.mxu0 %v374
    %376 = vmatprep.subr.mxu0 0.0
    %v377 = vand.u32 %v130, 4294901760
    %v378 = vsub.f32 %v130, %v377
    %v379 = vand.u32 %v378, 4294901760
    %v380 = vsub.f32 %v378, %v379
    %v381 = vand.u32 %v380, 4294901760
    %382 = vmatpush1.msra.mxu0 %v381
    %383 = vmatprep.subr.mxu0 0.0
    %v384 = vand.u32 %v131, 4294901760
    %v385 = vsub.f32 %v131, %v384
    %v386 = vand.u32 %v385, 4294901760
    %v387 = vsub.f32 %v385, %v386
    %v388 = vand.u32 %v387, 4294901760
    %389 = vmatpush1.msra.mxu0 %v388
    %390 = vmatprep.subr.mxu0 0.0
    %v391 = vand.u32 %v132, 4294901760
    %v392 = vsub.f32 %v132, %v391
    %v393 = vand.u32 %v392, 4294901760
    %v394 = vsub.f32 %v392, %v393
    %v395 = vand.u32 %v394, 4294901760
    %396 = vmatpush1.msra.mxu0 %v395
    %397 = vmatprep.subr.mxu0 0.0
    %v398 = vand.u32 %v133, 4294901760
    %v399 = vsub.f32 %v133, %v398
    %v400 = vand.u32 %v399, 4294901760
    %v401 = vsub.f32 %v399, %v400
    %v402 = vand.u32 %v401, 4294901760
    %403 = vmatpush1.msra.mxu0 %v402
    %404 = vmatprep.subr.mxu0 0.0
    %v405 = vand.u32 %v134, 4294901760
    %v406 = vsub.f32 %v134, %v405
    %v407 = vand.u32 %v406, 4294901760
    %v408 = vsub.f32 %v406, %v407
    %v409 = vand.u32 %v408, 4294901760
    %410 = vmatpush1.msra.mxu0 %v409
    %411 = vmatprep.subr.mxu0 0.0
    %v412 = vand.u32 %v135, 4294901760
    %v413 = vsub.f32 %v135, %v412
    %v414 = vand.u32 %v413, 4294901760
    %v415 = vsub.f32 %v413, %v414
    %v416 = vand.u32 %v415, 4294901760
    %417 = vmatpush1.msra.mxu0 %v416
    %418 = vmatprep.subr.mxu0 0.0
    %v419 = vand.u32 %v136, 4294901760
    %v420 = vsub.f32 %v136, %v419
    %v421 = vand.u32 %v420, 4294901760
    %v422 = vsub.f32 %v420, %v421
    %v423 = vand.u32 %v422, 4294901760
    %424 = vmatpush1.msra.mxu0 %v423
    %425 = vmatprep.subr.mxu0 0.0
    %v426 = vand.u32 %v137, 4294901760
    %v427 = vsub.f32 %v137, %v426
    %v428 = vand.u32 %v427, 4294901760
    %v429 = vsub.f32 %v427, %v428
    %v430 = vand.u32 %v429, 4294901760
    %431 = vmatpush1.msra.mxu0 %v430
    %432 = vmatprep.subr.mxu0 0.0
    %v433 = vand.u32 %v138, 4294901760
    %v434 = vsub.f32 %v138, %v433
    %v435 = vand.u32 %v434, 4294901760
    %v436 = vsub.f32 %v434, %v435
    %v437 = vand.u32 %v436, 4294901760
    %438 = vmatpush1.msra.mxu0 %v437
    %439 = vmatprep.subr.mxu0 0.0
    %v440 = vand.u32 %v139, 4294901760
    %v441 = vsub.f32 %v139, %v440
    %v442 = vand.u32 %v441, 4294901760
    %v443 = vsub.f32 %v441, %v442
    %v444 = vand.u32 %v443, 4294901760
    %445 = vmatpush1.msra.mxu0 %v444
    %446 = vmatprep.subr.mxu0 0.0
    %v447 = vand.u32 %v140, 4294901760
    %v448 = vsub.f32 %v140, %v447
    %v449 = vand.u32 %v448, 4294901760
    %v450 = vsub.f32 %v448, %v449
    %v451 = vand.u32 %v450, 4294901760
    %452 = vmatpush1.msra.mxu0 %v451
    %453 = vmatprep.subr.mxu0 0.0
    %v454 = vand.u32 %v141, 4294901760
    %v455 = vsub.f32 %v141, %v454
    %v456 = vand.u32 %v455, 4294901760
    %v457 = vsub.f32 %v455, %v456
    %v458 = vand.u32 %v457, 4294901760
    %459 = vmatpush1.msra.mxu0 %v458
    %460 = vmatprep.subr.mxu0 0.0
    %v461 = vand.u32 %v142, 4294901760
    %v462 = vsub.f32 %v142, %v461
    %v463 = vand.u32 %v462, 4294901760
    %v464 = vsub.f32 %v462, %v463
    %v465 = vand.u32 %v464, 4294901760
    %466 = vmatpush1.msra.mxu0 %v465
    %467 = vmatprep.subr.mxu0 0.0
    %v468 = vand.u32 %v143, 4294901760
    %v469 = vsub.f32 %v143, %v468
    %v470 = vand.u32 %v469, 4294901760
    %v471 = vsub.f32 %v469, %v470
    %v472 = vand.u32 %v471, 4294901760
    %473 = vmatpush1.msra.mxu0 %v472
    %474 = vmatprep.subr.mxu0 0.0
    %v475 = vand.u32 %v144, 4294901760
    %v476 = vsub.f32 %v144, %v475
    %v477 = vand.u32 %v476, 4294901760
    %v478 = vsub.f32 %v476, %v477
    %v479 = vand.u32 %v478, 4294901760
    %480 = vmatpush1.msra.mxu0 %v479
    %v481 = vand.u32 %v112, 4294901760
    %482 = vmatprep.mubr.f32.mxu0 %v481
    %v483 = vand.u32 %v111, 4294901760
    %484 = vmatmul.mubr.f32.gmra.mrb[0].mxu0 %v483
    %v485 = vpop.f32.mrb[0].mxu0
    %v486 = vadd.f32 %v254, %v485
    %v487 = vpop.f32.mrb[0].mxu0
    %488 = vdwg.mxu0
    %489 = vmatprep.subr.mxu0 0.0
    %v490 = vand.u32 %v113, 4294901760
    %v491 = vsub.f32 %v113, %v490
    %492 = vmatpush1.msra.mxu0 %v491
    %493 = vmatprep.subr.mxu0 0.0
    %v494 = vand.u32 %v114, 4294901760
    %v495 = vsub.f32 %v114, %v494
    %496 = vmatpush1.msra.mxu0 %v495
    %497 = vmatprep.subr.mxu0 0.0
    %v498 = vand.u32 %v115, 4294901760
    %v499 = vsub.f32 %v115, %v498
    %500 = vmatpush1.msra.mxu0 %v499
    %501 = vmatprep.subr.mxu0 0.0
    %v502 = vand.u32 %v116, 4294901760
    %v503 = vsub.f32 %v116, %v502
    %504 = vmatpush1.msra.mxu0 %v503
    %505 = vmatprep.subr.mxu0 0.0
    %v506 = vand.u32 %v117, 4294901760
    %v507 = vsub.f32 %v117, %v506
    %508 = vmatpush1.msra.mxu0 %v507
    %509 = vmatprep.subr.mxu0 0.0
    %v510 = vand.u32 %v118, 4294901760
    %v511 = vsub.f32 %v118, %v510
    %512 = vmatpush1.msra.mxu0 %v511
    %513 = vmatprep.subr.mxu0 0.0
    %v514 = vand.u32 %v119, 4294901760
    %v515 = vsub.f32 %v119, %v514
    %516 = vmatpush1.msra.mxu0 %v515
    %517 = vmatprep.subr.mxu0 0.0
    %v518 = vand.u32 %v120, 4294901760
    %v519 = vsub.f32 %v120, %v518
    %520 = vmatpush1.msra.mxu0 %v519
    %521 = vmatprep.subr.mxu0 0.0
    %v522 = vand.u32 %v121, 4294901760
    %v523 = vsub.f32 %v121, %v522
    %524 = vmatpush1.msra.mxu0 %v523
    %525 = vmatprep.subr.mxu0 0.0
    %v526 = vand.u32 %v122, 4294901760
    %v527 = vsub.f32 %v122, %v526
    %528 = vmatpush1.msra.mxu0 %v527
    %529 = vmatprep.subr.mxu0 0.0
    %v530 = vand.u32 %v123, 4294901760
    %v531 = vsub.f32 %v123, %v530
    %532 = vmatpush1.msra.mxu0 %v531
    %533 = vmatprep.subr.mxu0 0.0
    %v534 = vand.u32 %v124, 4294901760
    %v535 = vsub.f32 %v124, %v534
    %536 = vmatpush1.msra.mxu0 %v535
    %537 = vmatprep.subr.mxu0 0.0
    %v538 = vand.u32 %v125, 4294901760
    %v539 = vsub.f32 %v125, %v538
    %540 = vmatpush1.msra.mxu0 %v539
    %541 = vmatprep.subr.mxu0 0.0
    %v542 = vand.u32 %v126, 4294901760
    %v543 = vsub.f32 %v126, %v542
    %544 = vmatpush1.msra.mxu0 %v543
    %545 = vmatprep.subr.mxu0 0.0
    %v546 = vand.u32 %v127, 4294901760
    %v547 = vsub.f32 %v127, %v546
    %548 = vmatpush1.msra.mxu0 %v547
    %549 = vmatprep.subr.mxu0 0.0
    %v550 = vand.u32 %v128, 4294901760
    %v551 = vsub.f32 %v128, %v550
    %552 = vmatpush1.msra.mxu0 %v551
    %553 = vmatprep.subr.mxu0 0.0
    %v554 = vand.u32 %v129, 4294901760
    %v555 = vsub.f32 %v129, %v554
    %556 = vmatpush1.msra.mxu0 %v555
    %557 = vmatprep.subr.mxu0 0.0
    %v558 = vand.u32 %v130, 4294901760
    %v559 = vsub.f32 %v130, %v558
    %560 = vmatpush1.msra.mxu0 %v559
    %561 = vmatprep.subr.mxu0 0.0
    %v562 = vand.u32 %v131, 4294901760
    %v563 = vsub.f32 %v131, %v562
    %564 = vmatpush1.msra.mxu0 %v563
    %565 = vmatprep.subr.mxu0 0.0
    %v566 = vand.u32 %v132, 4294901760
    %v567 = vsub.f32 %v132, %v566
    %568 = vmatpush1.msra.mxu0 %v567
    %569 = vmatprep.subr.mxu0 0.0
    %v570 = vand.u32 %v133, 4294901760
    %v571 = vsub.f32 %v133, %v570
    %572 = vmatpush1.msra.mxu0 %v571
    %573 = vmatprep.subr.mxu0 0.0
    %v574 = vand.u32 %v134, 4294901760
    %v575 = vsub.f32 %v134, %v574
    %576 = vmatpush1.msra.mxu0 %v575
    %577 = vmatprep.subr.mxu0 0.0
    %v578 = vand.u32 %v135, 4294901760
    %v579 = vsub.f32 %v135, %v578
    %580 = vmatpush1.msra.mxu0 %v579
    %581 = vmatprep.subr.mxu0 0.0
    %v582 = vand.u32 %v136, 4294901760
    %v583 = vsub.f32 %v136, %v582
    %584 = vmatpush1.msra.mxu0 %v583
    %585 = vmatprep.subr.mxu0 0.0
    %v586 = vand.u32 %v137, 4294901760
    %v587 = vsub.f32 %v137, %v586
    %588 = vmatpush1.msra.mxu0 %v587
    %589 = vmatprep.subr.mxu0 0.0
    %v590 = vand.u32 %v138, 4294901760
    %v591 = vsub.f32 %v138, %v590
    %592 = vmatpush1.msra.mxu0 %v591
    %593 = vmatprep.subr.mxu0 0.0
    %v594 = vand.u32 %v139, 4294901760
    %v595 = vsub.f32 %v139, %v594
    %596 = vmatpush1.msra.mxu0 %v595
    %597 = vmatprep.subr.mxu0 0.0
    %v598 = vand.u32 %v140, 4294901760
    %v599 = vsub.f32 %v140, %v598
    %600 = vmatpush1.msra.mxu0 %v599
    %601 = vmatprep.subr.mxu0 0.0
    %v602 = vand.u32 %v141, 4294901760
    %v603 = vsub.f32 %v141, %v602
    %604 = vmatpush1.msra.mxu0 %v603
    %605 = vmatprep.subr.mxu0 0.0
    %v606 = vand.u32 %v142, 4294901760
    %v607 = vsub.f32 %v142, %v606
    %608 = vmatpush1.msra.mxu0 %v607
    %609 = vmatprep.subr.mxu0 0.0
    %v610 = vand.u32 %v143, 4294901760
    %v611 = vsub.f32 %v143, %v610
    %612 = vmatpush1.msra.mxu0 %v611
    %613 = vmatprep.subr.mxu0 0.0
    %v614 = vand.u32 %v144, 4294901760
    %v615 = vsub.f32 %v144, %v614
    %616 = vmatpush1.msra.mxu0 %v615
    %v617 = vand.u32 %v112, 4294901760
    %v618 = vsub.f32 %v112, %v617
    %619 = vmatprep.mubr.f32.mxu0 %v618
    %v620 = vand.u32 %v111, 4294901760
    %v621 = vsub.f32 %v111, %v620
    %622 = vmatmul.mubr.f32.gmra.mrb[0].mxu0 %v621
    %v623 = vpop.f32.mrb[0].mxu0
    %v624 = vadd.f32 %v486, %v623
    %v625 = vpop.f32.mrb[0].mxu0
    %626 = vdwg.mxu0
    %627 = vmatprep.subr.mxu0 0.0
    %v628 = vand.u32 %v113, 4294901760
    %629 = vmatpush1.msra.mxu0 %v628
    %630 = vmatprep.subr.mxu0 0.0
    %v631 = vand.u32 %v114, 4294901760
    %632 = vmatpush1.msra.mxu0 %v631
    %633 = vmatprep.subr.mxu0 0.0
    %v634 = vand.u32 %v115, 4294901760
    %635 = vmatpush1.msra.mxu0 %v634
    %636 = vmatprep.subr.mxu0 0.0
    %v637 = vand.u32 %v116, 4294901760
    %638 = vmatpush1.msra.mxu0 %v637
    %639 = vmatprep.subr.mxu0 0.0
    %v640 = vand.u32 %v117, 4294901760
    %641 = vmatpush1.msra.mxu0 %v640
    %642 = vmatprep.subr.mxu0 0.0
    %v643 = vand.u32 %v118, 4294901760
    %644 = vmatpush1.msra.mxu0 %v643
    %645 = vmatprep.subr.mxu0 0.0
    %v646 = vand.u32 %v119, 4294901760
    %647 = vmatpush1.msra.mxu0 %v646
    %648 = vmatprep.subr.mxu0 0.0
    %v649 = vand.u32 %v120, 4294901760
    %650 = vmatpush1.msra.mxu0 %v649
    %651 = vmatprep.subr.mxu0 0.0
    %v652 = vand.u32 %v121, 4294901760
    %653 = vmatpush1.msra.mxu0 %v652
    %654 = vmatprep.subr.mxu0 0.0
    %v655 = vand.u32 %v122, 4294901760
    %656 = vmatpush1.msra.mxu0 %v655
    %657 = vmatprep.subr.mxu0 0.0
    %v658 = vand.u32 %v123, 4294901760
    %659 = vmatpush1.msra.mxu0 %v658
    %660 = vmatprep.subr.mxu0 0.0
    %v661 = vand.u32 %v124, 4294901760
    %662 = vmatpush1.msra.mxu0 %v661
    %663 = vmatprep.subr.mxu0 0.0
    %v664 = vand.u32 %v125, 4294901760
    %665 = vmatpush1.msra.mxu0 %v664
    %666 = vmatprep.subr.mxu0 0.0
    %v667 = vand.u32 %v126, 4294901760
    %668 = vmatpush1.msra.mxu0 %v667
    %669 = vmatprep.subr.mxu0 0.0
    %v670 = vand.u32 %v127, 4294901760
    %671 = vmatpush1.msra.mxu0 %v670
    %672 = vmatprep.subr.mxu0 0.0
    %v673 = vand.u32 %v128, 4294901760
    %674 = vmatpush1.msra.mxu0 %v673
    %675 = vmatprep.subr.mxu0 0.0
    %v676 = vand.u32 %v129, 4294901760
    %677 = vmatpush1.msra.mxu0 %v676
    %678 = vmatprep.subr.mxu0 0.0
    %v679 = vand.u32 %v130, 4294901760
    %680 = vmatpush1.msra.mxu0 %v679
    %681 = vmatprep.subr.mxu0 0.0
    %v682 = vand.u32 %v131, 4294901760
    %683 = vmatpush1.msra.mxu0 %v682
    %684 = vmatprep.subr.mxu0 0.0
    %v685 = vand.u32 %v132, 4294901760
    %686 = vmatpush1.msra.mxu0 %v685
    %687 = vmatprep.subr.mxu0 0.0
    %v688 = vand.u32 %v133, 4294901760
    %689 = vmatpush1.msra.mxu0 %v688
    %690 = vmatprep.subr.mxu0 0.0
    %v691 = vand.u32 %v134, 4294901760
    %692 = vmatpush1.msra.mxu0 %v691
    %693 = vmatprep.subr.mxu0 0.0
    %v694 = vand.u32 %v135, 4294901760
    %695 = vmatpush1.msra.mxu0 %v694
    %696 = vmatprep.subr.mxu0 0.0
    %v697 = vand.u32 %v136, 4294901760
    %698 = vmatpush1.msra.mxu0 %v697
    %699 = vmatprep.subr.mxu0 0.0
    %v700 = vand.u32 %v137, 4294901760
    %701 = vmatpush1.msra.mxu0 %v700
    %702 = vmatprep.subr.mxu0 0.0
    %v703 = vand.u32 %v138, 4294901760
    %704 = vmatpush1.msra.mxu0 %v703
    %705 = vmatprep.subr.mxu0 0.0
    %v706 = vand.u32 %v139, 4294901760
    %707 = vmatpush1.msra.mxu0 %v706
    %708 = vmatprep.subr.mxu0 0.0
    %v709 = vand.u32 %v140, 4294901760
    %710 = vmatpush1.msra.mxu0 %v709
    %711 = vmatprep.subr.mxu0 0.0
    %v712 = vand.u32 %v141, 4294901760
    %713 = vmatpush1.msra.mxu0 %v712
    %714 = vmatprep.subr.mxu0 0.0
    %v715 = vand.u32 %v142, 4294901760
    %716 = vmatpush1.msra.mxu0 %v715
    %717 = vmatprep.subr.mxu0 0.0
    %v718 = vand.u32 %v143, 4294901760
    %719 = vmatpush1.msra.mxu0 %v718
    %720 = vmatprep.subr.mxu0 0.0
    %v721 = vand.u32 %v144, 4294901760
    %722 = vmatpush1.msra.mxu0 %v721
    %v723 = vand.u32 %v112, 4294901760
    %v724 = vsub.f32 %v112, %v723
    %v725 = vand.u32 %v724, 4294901760
    %726 = vmatprep.mubr.f32.mxu0 %v725
    %v727 = vand.u32 %v111, 4294901760
    %v728 = vsub.f32 %v111, %v727
    %v729 = vand.u32 %v728, 4294901760
    %730 = vmatmul.mubr.f32.gmra.mrb[0].mxu0 %v729
    %v731 = vpop.f32.mrb[0].mxu0
    %v732 = vadd.f32 %v624, %v731
    %v733 = vpop.f32.mrb[0].mxu0
    %734 = vdwg.mxu0
    %735 = vmatprep.subr.mxu0 0.0
    %v736 = vand.u32 %v113, 4294901760
    %v737 = vsub.f32 %v113, %v736
    %v738 = vand.u32 %v737, 4294901760
    %739 = vmatpush1.msra.mxu0 %v738
    %740 = vmatprep.subr.mxu0 0.0
    %v741 = vand.u32 %v114, 4294901760
    %v742 = vsub.f32 %v114, %v741
    %v743 = vand.u32 %v742, 4294901760
    %744 = vmatpush1.msra.mxu0 %v743
    %745 = vmatprep.subr.mxu0 0.0
    %v746 = vand.u32 %v115, 4294901760
    %v747 = vsub.f32 %v115, %v746
    %v748 = vand.u32 %v747, 4294901760
    %749 = vmatpush1.msra.mxu0 %v748
    %750 = vmatprep.subr.mxu0 0.0
    %v751 = vand.u32 %v116, 4294901760
    %v752 = vsub.f32 %v116, %v751
    %v753 = vand.u32 %v752, 4294901760
    %754 = vmatpush1.msra.mxu0 %v753
    %755 = vmatprep.subr.mxu0 0.0
    %v756 = vand.u32 %v117, 4294901760
    %v757 = vsub.f32 %v117, %v756
    %v758 = vand.u32 %v757, 4294901760
    %759 = vmatpush1.msra.mxu0 %v758
    %760 = vmatprep.subr.mxu0 0.0
    %v761 = vand.u32 %v118, 4294901760
    %v762 = vsub.f32 %v118, %v761
    %v763 = vand.u32 %v762, 4294901760
    %764 = vmatpush1.msra.mxu0 %v763
    %765 = vmatprep.subr.mxu0 0.0
    %v766 = vand.u32 %v119, 4294901760
    %v767 = vsub.f32 %v119, %v766
    %v768 = vand.u32 %v767, 4294901760
    %769 = vmatpush1.msra.mxu0 %v768
    %770 = vmatprep.subr.mxu0 0.0
    %v771 = vand.u32 %v120, 4294901760
    %v772 = vsub.f32 %v120, %v771
    %v773 = vand.u32 %v772, 4294901760
    %774 = vmatpush1.msra.mxu0 %v773
    %775 = vmatprep.subr.mxu0 0.0
    %v776 = vand.u32 %v121, 4294901760
    %v777 = vsub.f32 %v121, %v776
    %v778 = vand.u32 %v777, 4294901760
    %779 = vmatpush1.msra.mxu0 %v778
    %780 = vmatprep.subr.mxu0 0.0
    %v781 = vand.u32 %v122, 4294901760
    %v782 = vsub.f32 %v122, %v781
    %v783 = vand.u32 %v782, 4294901760
    %784 = vmatpush1.msra.mxu0 %v783
    %785 = vmatprep.subr.mxu0 0.0
    %v786 = vand.u32 %v123, 4294901760
    %v787 = vsub.f32 %v123, %v786
    %v788 = vand.u32 %v787, 4294901760
    %789 = vmatpush1.msra.mxu0 %v788
    %790 = vmatprep.subr.mxu0 0.0
    %v791 = vand.u32 %v124, 4294901760
    %v792 = vsub.f32 %v124, %v791
    %v793 = vand.u32 %v792, 4294901760
    %794 = vmatpush1.msra.mxu0 %v793
    %795 = vmatprep.subr.mxu0 0.0
    %v796 = vand.u32 %v125, 4294901760
    %v797 = vsub.f32 %v125, %v796
    %v798 = vand.u32 %v797, 4294901760
    %799 = vmatpush1.msra.mxu0 %v798
    %800 = vmatprep.subr.mxu0 0.0
    %v801 = vand.u32 %v126, 4294901760
    %v802 = vsub.f32 %v126, %v801
    %v803 = vand.u32 %v802, 4294901760
    %804 = vmatpush1.msra.mxu0 %v803
    %805 = vmatprep.subr.mxu0 0.0
    %v806 = vand.u32 %v127, 4294901760
    %v807 = vsub.f32 %v127, %v806
    %v808 = vand.u32 %v807, 4294901760
    %809 = vmatpush1.msra.mxu0 %v808
    %810 = vmatprep.subr.mxu0 0.0
    %v811 = vand.u32 %v128, 4294901760
    %v812 = vsub.f32 %v128, %v811
    %v813 = vand.u32 %v812, 4294901760
    %814 = vmatpush1.msra.mxu0 %v813
    %815 = vmatprep.subr.mxu0 0.0
    %v816 = vand.u32 %v129, 4294901760
    %v817 = vsub.f32 %v129, %v816
    %v818 = vand.u32 %v817, 4294901760
    %819 = vmatpush1.msra.mxu0 %v818
    %820 = vmatprep.subr.mxu0 0.0
    %v821 = vand.u32 %v130, 4294901760
    %v822 = vsub.f32 %v130, %v821
    %v823 = vand.u32 %v822, 4294901760
    %824 = vmatpush1.msra.mxu0 %v823
    %825 = vmatprep.subr.mxu0 0.0
    %v826 = vand.u32 %v131, 4294901760
    %v827 = vsub.f32 %v131, %v826
    %v828 = vand.u32 %v827, 4294901760
    %829 = vmatpush1.msra.mxu0 %v828
    %830 = vmatprep.subr.mxu0 0.0
    %v831 = vand.u32 %v132, 4294901760
    %v832 = vsub.f32 %v132, %v831
    %v833 = vand.u32 %v832, 4294901760
    %834 = vmatpush1.msra.mxu0 %v833
    %835 = vmatprep.subr.mxu0 0.0
    %v836 = vand.u32 %v133, 4294901760
    %v837 = vsub.f32 %v133, %v836
    %v838 = vand.u32 %v837, 4294901760
    %839 = vmatpush1.msra.mxu0 %v838
    %840 = vmatprep.subr.mxu0 0.0
    %v841 = vand.u32 %v134, 4294901760
    %v842 = vsub.f32 %v134, %v841
    %v843 = vand.u32 %v842, 4294901760
    %844 = vmatpush1.msra.mxu0 %v843
    %845 = vmatprep.subr.mxu0 0.0
    %v846 = vand.u32 %v135, 4294901760
    %v847 = vsub.f32 %v135, %v846
    %v848 = vand.u32 %v847, 4294901760
    %849 = vmatpush1.msra.mxu0 %v848
    %850 = vmatprep.subr.mxu0 0.0
    %v851 = vand.u32 %v136, 4294901760
    %v852 = vsub.f32 %v136, %v851
    %v853 = vand.u32 %v852, 4294901760
    %854 = vmatpush1.msra.mxu0 %v853
    %855 = vmatprep.subr.mxu0 0.0
    %v856 = vand.u32 %v137, 4294901760
    %v857 = vsub.f32 %v137, %v856
    %v858 = vand.u32 %v857, 4294901760
    %859 = vmatpush1.msra.mxu0 %v858
    %860 = vmatprep.subr.mxu0 0.0
    %v861 = vand.u32 %v138, 4294901760
    %v862 = vsub.f32 %v138, %v861
    %v863 = vand.u32 %v862, 4294901760
    %864 = vmatpush1.msra.mxu0 %v863
    %865 = vmatprep.subr.mxu0 0.0
    %v866 = vand.u32 %v139, 4294901760
    %v867 = vsub.f32 %v139, %v866
    %v868 = vand.u32 %v867, 4294901760
    %869 = vmatpush1.msra.mxu0 %v868
    %870 = vmatprep.subr.mxu0 0.0
    %v871 = vand.u32 %v140, 4294901760
    %v872 = vsub.f32 %v140, %v871
    %v873 = vand.u32 %v872, 4294901760
    %874 = vmatpush1.msra.mxu0 %v873
    %875 = vmatprep.subr.mxu0 0.0
    %v876 = vand.u32 %v141, 4294901760
    %v877 = vsub.f32 %v141, %v876
    %v878 = vand.u32 %v877, 4294901760
    %879 = vmatpush1.msra.mxu0 %v878
    %880 = vmatprep.subr.mxu0 0.0
    %v881 = vand.u32 %v142, 4294901760
    %v882 = vsub.f32 %v142, %v881
    %v883 = vand.u32 %v882, 4294901760
    %884 = vmatpush1.msra.mxu0 %v883
    %885 = vmatprep.subr.mxu0 0.0
    %v886 = vand.u32 %v143, 4294901760
    %v887 = vsub.f32 %v143, %v886
    %v888 = vand.u32 %v887, 4294901760
    %889 = vmatpush1.msra.mxu0 %v888
    %890 = vmatprep.subr.mxu0 0.0
    %v891 = vand.u32 %v144, 4294901760
    %v892 = vsub.f32 %v144, %v891
    %v893 = vand.u32 %v892, 4294901760
    %894 = vmatpush1.msra.mxu0 %v893
    %v895 = vand.u32 %v112, 4294901760
    %896 = vmatprep.mubr.f32.mxu0 %v895
    %v897 = vand.u32 %v111, 4294901760
    %898 = vmatmul.mubr.f32.gmra.mrb[0].mxu0 %v897
    %v899 = vpop.f32.mrb[0].mxu0
    %v900 = vadd.f32 %v732, %v899
    %v901 = vpop.f32.mrb[0].mxu0
    %902 = vdwg.mxu0
    %903 = vmatprep.subr.mxu0 0.0
    %v904 = vand.u32 %v113, 4294901760
    %905 = vmatpush1.msra.mxu0 %v904
    %906 = vmatprep.subr.mxu0 0.0
    %v907 = vand.u32 %v114, 4294901760
    %908 = vmatpush1.msra.mxu0 %v907
    %909 = vmatprep.subr.mxu0 0.0
    %v910 = vand.u32 %v115, 4294901760
    %911 = vmatpush1.msra.mxu0 %v910
    %912 = vmatprep.subr.mxu0 0.0
    %v913 = vand.u32 %v116, 4294901760
    %914 = vmatpush1.msra.mxu0 %v913
    %915 = vmatprep.subr.mxu0 0.0
    %v916 = vand.u32 %v117, 4294901760
    %917 = vmatpush1.msra.mxu0 %v916
    %918 = vmatprep.subr.mxu0 0.0
    %v919 = vand.u32 %v118, 4294901760
    %920 = vmatpush1.msra.mxu0 %v919
    %921 = vmatprep.subr.mxu0 0.0
    %v922 = vand.u32 %v119, 4294901760
    %923 = vmatpush1.msra.mxu0 %v922
    %924 = vmatprep.subr.mxu0 0.0
    %v925 = vand.u32 %v120, 4294901760
    %926 = vmatpush1.msra.mxu0 %v925
    %927 = vmatprep.subr.mxu0 0.0
    %v928 = vand.u32 %v121, 4294901760
    %929 = vmatpush1.msra.mxu0 %v928
    %930 = vmatprep.subr.mxu0 0.0
    %v931 = vand.u32 %v122, 4294901760
    %932 = vmatpush1.msra.mxu0 %v931
    %933 = vmatprep.subr.mxu0 0.0
    %v934 = vand.u32 %v123, 4294901760
    %935 = vmatpush1.msra.mxu0 %v934
    %936 = vmatprep.subr.mxu0 0.0
    %v937 = vand.u32 %v124, 4294901760
    %938 = vmatpush1.msra.mxu0 %v937
    %939 = vmatprep.subr.mxu0 0.0
    %v940 = vand.u32 %v125, 4294901760
    %941 = vmatpush1.msra.mxu0 %v940
    %942 = vmatprep.subr.mxu0 0.0
    %v943 = vand.u32 %v126, 4294901760
    %944 = vmatpush1.msra.mxu0 %v943
    %945 = vmatprep.subr.mxu0 0.0
    %v946 = vand.u32 %v127, 4294901760
    %947 = vmatpush1.msra.mxu0 %v946
    %948 = vmatprep.subr.mxu0 0.0
    %v949 = vand.u32 %v128, 4294901760
    %950 = vmatpush1.msra.mxu0 %v949
    %951 = vmatprep.subr.mxu0 0.0
    %v952 = vand.u32 %v129, 4294901760
    %953 = vmatpush1.msra.mxu0 %v952
    %954 = vmatprep.subr.mxu0 0.0
    %v955 = vand.u32 %v130, 4294901760
    %956 = vmatpush1.msra.mxu0 %v955
    %957 = vmatprep.subr.mxu0 0.0
    %v958 = vand.u32 %v131, 4294901760
    %959 = vmatpush1.msra.mxu0 %v958
    %960 = vmatprep.subr.mxu0 0.0
    %v961 = vand.u32 %v132, 4294901760
    %962 = vmatpush1.msra.mxu0 %v961
    %963 = vmatprep.subr.mxu0 0.0
    %v964 = vand.u32 %v133, 4294901760
    %965 = vmatpush1.msra.mxu0 %v964
    %966 = vmatprep.subr.mxu0 0.0
    %v967 = vand.u32 %v134, 4294901760
    %968 = vmatpush1.msra.mxu0 %v967
    %969 = vmatprep.subr.mxu0 0.0
    %v970 = vand.u32 %v135, 4294901760
    %971 = vmatpush1.msra.mxu0 %v970
    %972 = vmatprep.subr.mxu0 0.0
    %v973 = vand.u32 %v136, 4294901760
    %974 = vmatpush1.msra.mxu0 %v973
    %975 = vmatprep.subr.mxu0 0.0
    %v976 = vand.u32 %v137, 4294901760
    %977 = vmatpush1.msra.mxu0 %v976
    %978 = vmatprep.subr.mxu0 0.0
    %v979 = vand.u32 %v138, 4294901760
    %980 = vmatpush1.msra.mxu0 %v979
    %981 = vmatprep.subr.mxu0 0.0
    %v982 = vand.u32 %v139, 4294901760
    %983 = vmatpush1.msra.mxu0 %v982
    %984 = vmatprep.subr.mxu0 0.0
    %v985 = vand.u32 %v140, 4294901760
    %986 = vmatpush1.msra.mxu0 %v985
    %987 = vmatprep.subr.mxu0 0.0
    %v988 = vand.u32 %v141, 4294901760
    %989 = vmatpush1.msra.mxu0 %v988
    %990 = vmatprep.subr.mxu0 0.0
    %v991 = vand.u32 %v142, 4294901760
    %992 = vmatpush1.msra.mxu0 %v991
    %993 = vmatprep.subr.mxu0 0.0
    %v994 = vand.u32 %v143, 4294901760
    %995 = vmatpush1.msra.mxu0 %v994
    %996 = vmatprep.subr.mxu0 0.0
    %v997 = vand.u32 %v144, 4294901760
    %998 = vmatpush1.msra.mxu0 %v997
    %v999 = vand.u32 %v112, 4294901760
    %1000 = vmatprep.mubr.f32.mxu0 %v999
    %v1001 = vand.u32 %v111, 4294901760
    %1002 = vmatmul.mubr.f32.gmra.mrb[0].mxu0 %v1001
    %v1003 = vpop.f32.mrb[0].mxu0
    %v1004 = vadd.f32 %v900, %v1003
    %v1005 = vpop.f32.mrb[0].mxu0
    %1006 = vdwg.mxu0
    %v1007 = vmax.f32 %v1004, 0.0
    %v1008 = vld [vmem:[#allocation4] sm:$0xff]
    %v1009 = vld [vmem:[#allocation4 + $0x8] sm:$0xff]
    %v1010 = vld [vmem:[#allocation4 + $0x10] sm:$0xff]
    %v1011 = vld [vmem:[#allocation4 + $0x18] sm:$0xff]
    %v1012 = vld [vmem:[#allocation4 + $0x20] sm:$0xff]
    %v1013 = vld [vmem:[#allocation4 + $0x28] sm:$0xff]
    %v1014 = vld [vmem:[#allocation4 + $0x30] sm:$0xff]
    %v1015 = vld [vmem:[#allocation4 + $0x38] sm:$0xff]
    %v1016 = vld [vmem:[#allocation4 + $0x40] sm:$0xff]
    %v1017 = vld [vmem:[#allocation4 + $0x48] sm:$0xff]
    %v1018 = vld [vmem:[#allocation4 + $0x50] sm:$0xff]
    %v1019 = vld [vmem:[#allocation4 + $0x58] sm:$0xff]
    %v1020 = vld [vmem:[#allocation4 + $0x60] sm:$0xff]
    %v1021 = vld [vmem:[#allocation4 + $0x68] sm:$0xff]
    %v1022 = vld [vmem:[#allocation4 + $0x70] sm:$0xff]
    %v1023 = vld [vmem:[#allocation4 + $0x78] sm:$0xff]
    %1024 = vmatprep.subr.mxu0 0.0
    %v1025 = vand.u32 %v1008, 4294901760
    %1026 = vmatpush1.msra.mxu0 %v1025
    %1027 = vmatprep.subr.mxu0 0.0
    %v1028 = vand.u32 %v1009, 4294901760
    %1029 = vmatpush1.msra.mxu0 %v1028
    %1030 = vmatprep.subr.mxu0 0.0
    %v1031 = vand.u32 %v1010, 4294901760
    %1032 = vmatpush1.msra.mxu0 %v1031
    %1033 = vmatprep.subr.mxu0 0.0
    %v1034 = vand.u32 %v1011, 4294901760
    %1035 = vmatpush1.msra.mxu0 %v1034
    %1036 = vmatprep.subr.mxu0 0.0
    %v1037 = vand.u32 %v1012, 4294901760
    %1038 = vmatpush1.msra.mxu0 %v1037
    %1039 = vmatprep.subr.mxu0 0.0
    %v1040 = vand.u32 %v1013, 4294901760
    %1041 = vmatpush1.msra.mxu0 %v1040
    %1042 = vmatprep.subr.mxu0 0.0
    %v1043 = vand.u32 %v1014, 4294901760
    %1044 = vmatpush1.msra.mxu0 %v1043
    %1045 = vmatprep.subr.mxu0 0.0
    %v1046 = vand.u32 %v1015, 4294901760
    %1047 = vmatpush1.msra.mxu0 %v1046
    %1048 = vmatprep.subr.mxu0 0.0
    %v1049 = vand.u32 %v1016, 4294901760
    %1050 = vmatpush1.msra.mxu0 %v1049
    %1051 = vmatprep.subr.mxu0 0.0
    %v1052 = vand.u32 %v1017, 4294901760
    %1053 = vmatpush1.msra.mxu0 %v1052
    %1054 = vmatprep.subr.mxu0 0.0
    %v1055 = vand.u32 %v1018, 4294901760
    %1056 = vmatpush1.msra.mxu0 %v1055
    %1057 = vmatprep.subr.mxu0 0.0
    %v1058 = vand.u32 %v1019, 4294901760
    %1059 = vmatpush1.msra.mxu0 %v1058
    %1060 = vmatprep.subr.mxu0 0.0
    %v1061 = vand.u32 %v1020, 4294901760
    %1062 = vmatpush1.msra.mxu0 %v1061
    %1063 = vmatprep.subr.mxu0 0.0
    %v1064 = vand.u32 %v1021, 4294901760
    %1065 = vmatpush1.msra.mxu0 %v1064
    %1066 = vmatprep.subr.mxu0 0.0
    %v1067 = vand.u32 %v1022, 4294901760
    %1068 = vmatpush1.msra.mxu0 %v1067
    %1069 = vmatprep.subr.mxu0 0.0
    %v1070 = vand.u32 %v1023, 4294901760
    %1071 = vmatpush1.msra.mxu0 %v1070
    %1072 = vmatprep.subr.mxu0 0.0
    %1073 = vmatpush1.msra.mxu0 0.0
    %1074 = vmatprep.subr.mxu0 0.0
    %1075 = vmatpush1.msra.mxu0 0.0
    %1076 = vmatprep.subr.mxu0 0.0
    %1077 = vmatpush1.msra.mxu0 0.0
    %1078 = vmatprep.subr.mxu0 0.0
    %1079 = vmatpush1.msra.mxu0 0.0
    %1080 = vmatprep.subr.mxu0 0.0
    %1081 = vmatpush1.msra.mxu0 0.0
    %1082 = vmatprep.subr.mxu0 0.0
    %1083 = vmatpush1.msra.mxu0 0.0
    %1084 = vmatprep.subr.mxu0 0.0
    %1085 = vmatpush1.msra.mxu0 0.0
    %1086 = vmatprep.subr.mxu0 0.0
    %1087 = vmatpush1.msra.mxu0 0.0
    %1088 = vmatprep.subr.mxu0 0.0
    %1089 = vmatpush1.msra.mxu0 0.0
    %1090 = vmatprep.subr.mxu0 0.0
    %1091 = vmatpush1.msra.mxu0 0.0
    %1092 = vmatprep.subr.mxu0 0.0
    %1093 = vmatpush1.msra.mxu0 0.0
    %1094 = vmatprep.subr.mxu0 0.0
    %1095 = vmatpush1.msra.mxu0 0.0
    %1096 = vmatprep.subr.mxu0 0.0
    %1097 = vmatpush1.msra.mxu0 0.0
    %1098 = vmatprep.subr.mxu0 0.0
    %1099 = vmatpush1.msra.mxu0 0.0
    %1100 = vmatprep.subr.mxu0 0.0
    %1101 = vmatpush1.msra.mxu0 0.0
    %1102 = vmatprep.subr.mxu0 0.0
    %1103 = vmatpush1.msra.mxu0 0.0
    %1104 = vmatprep.mubr.f32.mxu0 0.0
    %v1105 = vand.u32 %v1007, 4294901760
    %v1106 = vsub.f32 %v1007, %v1105
    %v1107 = vand.u32 %v1106, 4294901760
    %v1108 = vsub.f32 %v1106, %v1107
    %v1109 = vand.u32 %v1108, 4294901760
    %1110 = vmatmul.mubr.f32.gmra.mrb[0].mxu0 %v1109
    %v1111 = vpop.f32.mrb[0].mxu0
    %v1112 = vadd.f32 0.0, %v1111
    %v1113 = vpop.f32.mrb[0].mxu0
    %1114 = vdwg.mxu0
    %1115 = vmatprep.subr.mxu0 0.0
    %v1116 = vand.u32 %v1008, 4294901760
    %v1117 = vsub.f32 %v1008, %v1116
    %v1118 = vand.u32 %v1117, 4294901760
    %v1119 = vsub.f32 %v1117, %v1118
    %v1120 = vand.u32 %v1119, 4294901760
    %1121 = vmatpush1.msra.mxu0 %v1120
    %1122 = vmatprep.subr.mxu0 0.0
    %v1123 = vand.u32 %v1009, 4294901760
    %v1124 = vsub.f32 %v1009, %v1123
    %v1125 = vand.u32 %v1124, 4294901760
    %v1126 = vsub.f32 %v1124, %v1125
    %v1127 = vand.u32 %v1126, 4294901760
    %1128 = vmatpush1.msra.mxu0 %v1127
    %1129 = vmatprep.subr.mxu0 0.0
    %v1130 = vand.u32 %v1010, 4294901760
    %v1131 = vsub.f32 %v1010, %v1130
    %v1132 = vand.u32 %v1131, 4294901760
    %v1133 = vsub.f32 %v1131, %v1132
    %v1134 = vand.u32 %v1133, 4294901760
    %1135 = vmatpush1.msra.mxu0 %v1134
    %1136 = vmatprep.subr.mxu0 0.0
    %v1137 = vand.u32 %v1011, 4294901760
    %v1138 = vsub.f32 %v1011, %v1137
    %v1139 = vand.u32 %v1138, 4294901760
    %v1140 = vsub.f32 %v1138, %v1139
    %v1141 = vand.u32 %v1140, 4294901760
    %1142 = vmatpush1.msra.mxu0 %v1141
    %1143 = vmatprep.subr.mxu0 0.0
    %v1144 = vand.u32 %v1012, 4294901760
    %v1145 = vsub.f32 %v1012, %v1144
    %v1146 = vand.u32 %v1145, 4294901760
    %v1147 = vsub.f32 %v1145, %v1146
    %v1148 = vand.u32 %v1147, 4294901760
    %1149 = vmatpush1.msra.mxu0 %v1148
    %1150 = vmatprep.subr.mxu0 0.0
    %v1151 = vand.u32 %v1013, 4294901760
    %v1152 = vsub.f32 %v1013, %v1151
    %v1153 = vand.u32 %v1152, 4294901760
    %v1154 = vsub.f32 %v1152, %v1153
    %v1155 = vand.u32 %v1154, 4294901760
    %1156 = vmatpush1.msra.mxu0 %v1155
    %1157 = vmatprep.subr.mxu0 0.0
    %v1158 = vand.u32 %v1014, 4294901760
    %v1159 = vsub.f32 %v1014, %v1158
    %v1160 = vand.u32 %v1159, 4294901760
    %v1161 = vsub.f32 %v1159, %v1160
    %v1162 = vand.u32 %v1161, 4294901760
    %1163 = vmatpush1.msra.mxu0 %v1162
    %1164 = vmatprep.subr.mxu0 0.0
    %v1165 = vand.u32 %v1015, 4294901760
    %v1166 = vsub.f32 %v1015, %v1165
    %v1167 = vand.u32 %v1166, 4294901760
    %v1168 = vsub.f32 %v1166, %v1167
    %v1169 = vand.u32 %v1168, 4294901760
    %1170 = vmatpush1.msra.mxu0 %v1169
    %1171 = vmatprep.subr.mxu0 0.0
    %v1172 = vand.u32 %v1016, 4294901760
    %v1173 = vsub.f32 %v1016, %v1172
    %v1174 = vand.u32 %v1173, 4294901760
    %v1175 = vsub.f32 %v1173, %v1174
    %v1176 = vand.u32 %v1175, 4294901760
    %1177 = vmatpush1.msra.mxu0 %v1176
    %1178 = vmatprep.subr.mxu0 0.0
    %v1179 = vand.u32 %v1017, 4294901760
    %v1180 = vsub.f32 %v1017, %v1179
    %v1181 = vand.u32 %v1180, 4294901760
    %v1182 = vsub.f32 %v1180, %v1181
    %v1183 = vand.u32 %v1182, 4294901760
    %1184 = vmatpush1.msra.mxu0 %v1183
    %1185 = vmatprep.subr.mxu0 0.0
    %v1186 = vand.u32 %v1018, 4294901760
    %v1187 = vsub.f32 %v1018, %v1186
    %v1188 = vand.u32 %v1187, 4294901760
    %v1189 = vsub.f32 %v1187, %v1188
    %v1190 = vand.u32 %v1189, 4294901760
    %1191 = vmatpush1.msra.mxu0 %v1190
    %1192 = vmatprep.subr.mxu0 0.0
    %v1193 = vand.u32 %v1019, 4294901760
    %v1194 = vsub.f32 %v1019, %v1193
    %v1195 = vand.u32 %v1194, 4294901760
    %v1196 = vsub.f32 %v1194, %v1195
    %v1197 = vand.u32 %v1196, 4294901760
    %1198 = vmatpush1.msra.mxu0 %v1197
    %1199 = vmatprep.subr.mxu0 0.0
    %v1200 = vand.u32 %v1020, 4294901760
    %v1201 = vsub.f32 %v1020, %v1200
    %v1202 = vand.u32 %v1201, 4294901760
    %v1203 = vsub.f32 %v1201, %v1202
    %v1204 = vand.u32 %v1203, 4294901760
    %1205 = vmatpush1.msra.mxu0 %v1204
    %1206 = vmatprep.subr.mxu0 0.0
    %v1207 = vand.u32 %v1021, 4294901760
    %v1208 = vsub.f32 %v1021, %v1207
    %v1209 = vand.u32 %v1208, 4294901760
    %v1210 = vsub.f32 %v1208, %v1209
    %v1211 = vand.u32 %v1210, 4294901760
    %1212 = vmatpush1.msra.mxu0 %v1211
    %1213 = vmatprep.subr.mxu0 0.0
    %v1214 = vand.u32 %v1022, 4294901760
    %v1215 = vsub.f32 %v1022, %v1214
    %v1216 = vand.u32 %v1215, 4294901760
    %v1217 = vsub.f32 %v1215, %v1216
    %v1218 = vand.u32 %v1217, 4294901760
    %1219 = vmatpush1.msra.mxu0 %v1218
    %1220 = vmatprep.subr.mxu0 0.0
    %v1221 = vand.u32 %v1023, 4294901760
    %v1222 = vsub.f32 %v1023, %v1221
    %v1223 = vand.u32 %v1222, 4294901760
    %v1224 = vsub.f32 %v1222, %v1223
    %v1225 = vand.u32 %v1224, 4294901760
    %1226 = vmatpush1.msra.mxu0 %v1225
    %1227 = vmatprep.subr.mxu0 0.0
    %1228 = vmatpush1.msra.mxu0 0.0
    %1229 = vmatprep.subr.mxu0 0.0
    %1230 = vmatpush1.msra.mxu0 0.0
    %1231 = vmatprep.subr.mxu0 0.0
    %1232 = vmatpush1.msra.mxu0 0.0
    %1233 = vmatprep.subr.mxu0 0.0
    %1234 = vmatpush1.msra.mxu0 0.0
    %1235 = vmatprep.subr.mxu0 0.0
    %1236 = vmatpush1.msra.mxu0 0.0
    %1237 = vmatprep.subr.mxu0 0.0
    %1238 = vmatpush1.msra.mxu0 0.0
    %1239 = vmatprep.subr.mxu0 0.0
    %1240 = vmatpush1.msra.mxu0 0.0
    %1241 = vmatprep.subr.mxu0 0.0
    %1242 = vmatpush1.msra.mxu0 0.0
    %1243 = vmatprep.subr.mxu0 0.0
    %1244 = vmatpush1.msra.mxu0 0.0
    %1245 = vmatprep.subr.mxu0 0.0
    %1246 = vmatpush1.msra.mxu0 0.0
    %1247 = vmatprep.subr.mxu0 0.0
    %1248 = vmatpush1.msra.mxu0 0.0
    %1249 = vmatprep.subr.mxu0 0.0
    %1250 = vmatpush1.msra.mxu0 0.0
    %1251 = vmatprep.subr.mxu0 0.0
    %1252 = vmatpush1.msra.mxu0 0.0
    %1253 = vmatprep.subr.mxu0 0.0
    %1254 = vmatpush1.msra.mxu0 0.0
    %1255 = vmatprep.subr.mxu0 0.0
    %1256 = vmatpush1.msra.mxu0 0.0
    %1257 = vmatprep.subr.mxu0 0.0
    %1258 = vmatpush1.msra.mxu0 0.0
    %1259 = vmatprep.mubr.f32.mxu0 0.0
    %v1260 = vand.u32 %v1007, 4294901760
    %1261 = vmatmul.mubr.f32.gmra.mrb[0].mxu0 %v1260
    %v1262 = vpop.f32.mrb[0].mxu0
    %v1263 = vadd.f32 %v1112, %v1262
    %v1264 = vpop.f32.mrb[0].mxu0
    %1265 = vdwg.mxu0
    %1266 = vmatprep.subr.mxu0 0.0
    %v1267 = vand.u32 %v1008, 4294901760
    %v1268 = vsub.f32 %v1008, %v1267
    %1269 = vmatpush1.msra.mxu0 %v1268
    %1270 = vmatprep.subr.mxu0 0.0
    %v1271 = vand.u32 %v1009, 4294901760
    %v1272 = vsub.f32 %v1009, %v1271
    %1273 = vmatpush1.msra.mxu0 %v1272
    %1274 = vmatprep.subr.mxu0 0.0
    %v1275 = vand.u32 %v1010, 4294901760
    %v1276 = vsub.f32 %v1010, %v1275
    %1277 = vmatpush1.msra.mxu0 %v1276
    %1278 = vmatprep.subr.mxu0 0.0
    %v1279 = vand.u32 %v1011, 4294901760
    %v1280 = vsub.f32 %v1011, %v1279
    %1281 = vmatpush1.msra.mxu0 %v1280
    %1282 = vmatprep.subr.mxu0 0.0
    %v1283 = vand.u32 %v1012, 4294901760
    %v1284 = vsub.f32 %v1012, %v1283
    %1285 = vmatpush1.msra.mxu0 %v1284
    %1286 = vmatprep.subr.mxu0 0.0
    %v1287 = vand.u32 %v1013, 4294901760
    %v1288 = vsub.f32 %v1013, %v1287
    %1289 = vmatpush1.msra.mxu0 %v1288
    %1290 = vmatprep.subr.mxu0 0.0
    %v1291 = vand.u32 %v1014, 4294901760
    %v1292 = vsub.f32 %v1014, %v1291
    %1293 = vmatpush1.msra.mxu0 %v1292
    %1294 = vmatprep.subr.mxu0 0.0
    %v1295 = vand.u32 %v1015, 4294901760
    %v1296 = vsub.f32 %v1015, %v1295
    %1297 = vmatpush1.msra.mxu0 %v1296
    %1298 = vmatprep.subr.mxu0 0.0
    %v1299 = vand.u32 %v1016, 4294901760
    %v1300 = vsub.f32 %v1016, %v1299
    %1301 = vmatpush1.msra.mxu0 %v1300
    %1302 = vmatprep.subr.mxu0 0.0
    %v1303 = vand.u32 %v1017, 4294901760
    %v1304 = vsub.f32 %v1017, %v1303
    %1305 = vmatpush1.msra.mxu0 %v1304
    %1306 = vmatprep.subr.mxu0 0.0
    %v1307 = vand.u32 %v1018, 4294901760
    %v1308 = vsub.f32 %v1018, %v1307
    %1309 = vmatpush1.msra.mxu0 %v1308
    %1310 = vmatprep.subr.mxu0 0.0
    %v1311 = vand.u32 %v1019, 4294901760
    %v1312 = vsub.f32 %v1019, %v1311
    %1313 = vmatpush1.msra.mxu0 %v1312
    %1314 = vmatprep.subr.mxu0 0.0
    %v1315 = vand.u32 %v1020, 4294901760
    %v1316 = vsub.f32 %v1020, %v1315
    %1317 = vmatpush1.msra.mxu0 %v1316
    %1318 = vmatprep.subr.mxu0 0.0
    %v1319 = vand.u32 %v1021, 4294901760
    %v1320 = vsub.f32 %v1021, %v1319
    %1321 = vmatpush1.msra.mxu0 %v1320
    %1322 = vmatprep.subr.mxu0 0.0
    %v1323 = vand.u32 %v1022, 4294901760
    %v1324 = vsub.f32 %v1022, %v1323
    %1325 = vmatpush1.msra.mxu0 %v1324
    %1326 = vmatprep.subr.mxu0 0.0
    %v1327 = vand.u32 %v1023, 4294901760
    %v1328 = vsub.f32 %v1023, %v1327
    %1329 = vmatpush1.msra.mxu0 %v1328
    %1330 = vmatprep.subr.mxu0 0.0
    %1331 = vmatpush1.msra.mxu0 0.0
    %1332 = vmatprep.subr.mxu0 0.0
    %1333 = vmatpush1.msra.mxu0 0.0
    %1334 = vmatprep.subr.mxu0 0.0
    %1335 = vmatpush1.msra.mxu0 0.0
    %1336 = vmatprep.subr.mxu0 0.0
    %1337 = vmatpush1.msra.mxu0 0.0
    %1338 = vmatprep.subr.mxu0 0.0
    %1339 = vmatpush1.msra.mxu0 0.0
    %1340 = vmatprep.subr.mxu0 0.0
    %1341 = vmatpush1.msra.mxu0 0.0
    %1342 = vmatprep.subr.mxu0 0.0
    %1343 = vmatpush1.msra.mxu0 0.0
    %1344 = vmatprep.subr.mxu0 0.0
    %1345 = vmatpush1.msra.mxu0 0.0
    %1346 = vmatprep.subr.mxu0 0.0
    %1347 = vmatpush1.msra.mxu0 0.0
    %1348 = vmatprep.subr.mxu0 0.0
    %1349 = vmatpush1.msra.mxu0 0.0
    %1350 = vmatprep.subr.mxu0 0.0
    %1351 = vmatpush1.msra.mxu0 0.0
    %1352 = vmatprep.subr.mxu0 0.0
    %1353 = vmatpush1.msra.mxu0 0.0
    %1354 = vmatprep.subr.mxu0 0.0
    %1355 = vmatpush1.msra.mxu0 0.0
    %1356 = vmatprep.subr.mxu0 0.0
    %1357 = vmatpush1.msra.mxu0 0.0
    %1358 = vmatprep.subr.mxu0 0.0
    %1359 = vmatpush1.msra.mxu0 0.0
    %1360 = vmatprep.subr.mxu0 0.0
    %1361 = vmatpush1.msra.mxu0 0.0
    %1362 = vmatprep.mubr.f32.mxu0 0.0
    %v1363 = vand.u32 %v1007, 4294901760
    %v1364 = vsub.f32 %v1007, %v1363
    %1365 = vmatmul.mubr.f32.gmra.mrb[0].mxu0 %v1364
    %v1366 = vpop.f32.mrb[0].mxu0
    %v1367 = vadd.f32 %v1263, %v1366
    %v1368 = vpop.f32.mrb[0].mxu0
    %1369 = vdwg.mxu0
    %1370 = vmatprep.subr.mxu0 0.0
    %v1371 = vand.u32 %v1008, 4294901760
    %1372 = vmatpush1.msra.mxu0 %v1371
    %1373 = vmatprep.subr.mxu0 0.0
    %v1374 = vand.u32 %v1009, 4294901760
    %1375 = vmatpush1.msra.mxu0 %v1374
    %1376 = vmatprep.subr.mxu0 0.0
    %v1377 = vand.u32 %v1010, 4294901760
    %1378 = vmatpush1.msra.mxu0 %v1377
    %1379 = vmatprep.subr.mxu0 0.0
    %v1380 = vand.u32 %v1011, 4294901760
    %1381 = vmatpush1.msra.mxu0 %v1380
    %1382 = vmatprep.subr.mxu0 0.0
    %v1383 = vand.u32 %v1012, 4294901760
    %1384 = vmatpush1.msra.mxu0 %v1383
    %1385 = vmatprep.subr.mxu0 0.0
    %v1386 = vand.u32 %v1013, 4294901760
    %1387 = vmatpush1.msra.mxu0 %v1386
    %1388 = vmatprep.subr.mxu0 0.0
    %v1389 = vand.u32 %v1014, 4294901760
    %1390 = vmatpush1.msra.mxu0 %v1389
    %1391 = vmatprep.subr.mxu0 0.0
    %v1392 = vand.u32 %v1015, 4294901760
    %1393 = vmatpush1.msra.mxu0 %v1392
    %1394 = vmatprep.subr.mxu0 0.0
    %v1395 = vand.u32 %v1016, 4294901760
    %1396 = vmatpush1.msra.mxu0 %v1395
    %1397 = vmatprep.subr.mxu0 0.0
    %v1398 = vand.u32 %v1017, 4294901760
    %1399 = vmatpush1.msra.mxu0 %v1398
    %1400 = vmatprep.subr.mxu0 0.0
    %v1401 = vand.u32 %v1018, 4294901760
    %1402 = vmatpush1.msra.mxu0 %v1401
    %1403 = vmatprep.subr.mxu0 0.0
    %v1404 = vand.u32 %v1019, 4294901760
    %1405 = vmatpush1.msra.mxu0 %v1404
    %1406 = vmatprep.subr.mxu0 0.0
    %v1407 = vand.u32 %v1020, 4294901760
    %1408 = vmatpush1.msra.mxu0 %v1407
    %1409 = vmatprep.subr.mxu0 0.0
    %v1410 = vand.u32 %v1021, 4294901760
    %1411 = vmatpush1.msra.mxu0 %v1410
    %1412 = vmatprep.subr.mxu0 0.0
    %v1413 = vand.u32 %v1022, 4294901760
    %1414 = vmatpush1.msra.mxu0 %v1413
    %1415 = vmatprep.subr.mxu0 0.0
    %v1416 = vand.u32 %v1023, 4294901760
    %1417 = vmatpush1.msra.mxu0 %v1416
    %1418 = vmatprep.subr.mxu0 0.0
    %1419 = vmatpush1.msra.mxu0 0.0
    %1420 = vmatprep.subr.mxu0 0.0
    %1421 = vmatpush1.msra.mxu0 0.0
    %1422 = vmatprep.subr.mxu0 0.0
    %1423 = vmatpush1.msra.mxu0 0.0
    %1424 = vmatprep.subr.mxu0 0.0
    %1425 = vmatpush1.msra.mxu0 0.0
    %1426 = vmatprep.subr.mxu0 0.0
    %1427 = vmatpush1.msra.mxu0 0.0
    %1428 = vmatprep.subr.mxu0 0.0
    %1429 = vmatpush1.msra.mxu0 0.0
    %1430 = vmatprep.subr.mxu0 0.0
    %1431 = vmatpush1.msra.mxu0 0.0
    %1432 = vmatprep.subr.mxu0 0.0
    %1433 = vmatpush1.msra.mxu0 0.0
    %1434 = vmatprep.subr.mxu0 0.0
    %1435 = vmatpush1.msra.mxu0 0.0
    %1436 = vmatprep.subr.mxu0 0.0
    %1437 = vmatpush1.msra.mxu0 0.0
    %1438 = vmatprep.subr.mxu0 0.0
    %1439 = vmatpush1.msra.mxu0 0.0
    %1440 = vmatprep.subr.mxu0 0.0
    %1441 = vmatpush1.msra.mxu0 0.0
    %1442 = vmatprep.subr.mxu0 0.0
    %1443 = vmatpush1.msra.mxu0 0.0
    %1444 = vmatprep.subr.mxu0 0.0
    %1445 = vmatpush1.msra.mxu0 0.0
    %1446 = vmatprep.subr.mxu0 0.0
    %1447 = vmatpush1.msra.mxu0 0.0
    %1448 = vmatprep.subr.mxu0 0.0
    %1449 = vmatpush1.msra.mxu0 0.0
    %1450 = vmatprep.mubr.f32.mxu0 0.0
    %v1451 = vand.u32 %v1007, 4294901760
    %v1452 = vsub.f32 %v1007, %v1451
    %v1453 = vand.u32 %v1452, 4294901760
    %1454 = vmatmul.mubr.f32.gmra.mrb[0].mxu0 %v1453
    %v1455 = vpop.f32.mrb[0].mxu0
    %v1456 = vadd.f32 %v1367, %v1455
    %v1457 = vpop.f32.mrb[0].mxu0
    %1458 = vdwg.mxu0
    %1459 = vmatprep.subr.mxu0 0.0
    %v1460 = vand.u32 %v1008, 4294901760
    %v1461 = vsub.f32 %v1008, %v1460
    %v1462 = vand.u32 %v1461, 4294901760
    %1463 = vmatpush1.msra.mxu0 %v1462
    %1464 = vmatprep.subr.mxu0 0.0
    %v1465 = vand.u32 %v1009, 4294901760
    %v1466 = vsub.f32 %v1009, %v1465
    %v1467 = vand.u32 %v1466, 4294901760
    %1468 = vmatpush1.msra.mxu0 %v1467
    %1469 = vmatprep.subr.mxu0 0.0
    %v1470 = vand.u32 %v1010, 4294901760
    %v1471 = vsub.f32 %v1010, %v1470
    %v1472 = vand.u32 %v1471, 4294901760
    %1473 = vmatpush1.msra.mxu0 %v1472
    %1474 = vmatprep.subr.mxu0 0.0
    %v1475 = vand.u32 %v1011, 4294901760
    %v1476 = vsub.f32 %v1011, %v1475
    %v1477 = vand.u32 %v1476, 4294901760
    %1478 = vmatpush1.msra.mxu0 %v1477
    %1479 = vmatprep.subr.mxu0 0.0
    %v1480 = vand.u32 %v1012, 4294901760
    %v1481 = vsub.f32 %v1012, %v1480
    %v1482 = vand.u32 %v1481, 4294901760
    %1483 = vmatpush1.msra.mxu0 %v1482
    %1484 = vmatprep.subr.mxu0 0.0
    %v1485 = vand.u32 %v1013, 4294901760
    %v1486 = vsub.f32 %v1013, %v1485
    %v1487 = vand.u32 %v1486, 4294901760
    %1488 = vmatpush1.msra.mxu0 %v1487
    %1489 = vmatprep.subr.mxu0 0.0
    %v1490 = vand.u32 %v1014, 4294901760
    %v1491 = vsub.f32 %v1014, %v1490
    %v1492 = vand.u32 %v1491, 4294901760
    %1493 = vmatpush1.msra.mxu0 %v1492
    %1494 = vmatprep.subr.mxu0 0.0
    %v1495 = vand.u32 %v1015, 4294901760
    %v1496 = vsub.f32 %v1015, %v1495
    %v1497 = vand.u32 %v1496, 4294901760
    %1498 = vmatpush1.msra.mxu0 %v1497
    %1499 = vmatprep.subr.mxu0 0.0
    %v1500 = vand.u32 %v1016, 4294901760
    %v1501 = vsub.f32 %v1016, %v1500
    %v1502 = vand.u32 %v1501, 4294901760
    %1503 = vmatpush1.msra.mxu0 %v1502
    %1504 = vmatprep.subr.mxu0 0.0
    %v1505 = vand.u32 %v1017, 4294901760
    %v1506 = vsub.f32 %v1017, %v1505
    %v1507 = vand.u32 %v1506, 4294901760
    %1508 = vmatpush1.msra.mxu0 %v1507
    %1509 = vmatprep.subr.mxu0 0.0
    %v1510 = vand.u32 %v1018, 4294901760
    %v1511 = vsub.f32 %v1018, %v1510
    %v1512 = vand.u32 %v1511, 4294901760
    %1513 = vmatpush1.msra.mxu0 %v1512
    %1514 = vmatprep.subr.mxu0 0.0
    %v1515 = vand.u32 %v1019, 4294901760
    %v1516 = vsub.f32 %v1019, %v1515
    %v1517 = vand.u32 %v1516, 4294901760
    %1518 = vmatpush1.msra.mxu0 %v1517
    %1519 = vmatprep.subr.mxu0 0.0
    %v1520 = vand.u32 %v1020, 4294901760
    %v1521 = vsub.f32 %v1020, %v1520
    %v1522 = vand.u32 %v1521, 4294901760
    %1523 = vmatpush1.msra.mxu0 %v1522
    %1524 = vmatprep.subr.mxu0 0.0
    %v1525 = vand.u32 %v1021, 4294901760
    %v1526 = vsub.f32 %v1021, %v1525
    %v1527 = vand.u32 %v1526, 4294901760
    %1528 = vmatpush1.msra.mxu0 %v1527
    %1529 = vmatprep.subr.mxu0 0.0
    %v1530 = vand.u32 %v1022, 4294901760
    %v1531 = vsub.f32 %v1022, %v1530
    %v1532 = vand.u32 %v1531, 4294901760
    %1533 = vmatpush1.msra.mxu0 %v1532
    %1534 = vmatprep.subr.mxu0 0.0
    %v1535 = vand.u32 %v1023, 4294901760
    %v1536 = vsub.f32 %v1023, %v1535
    %v1537 = vand.u32 %v1536, 4294901760
    %1538 = vmatpush1.msra.mxu0 %v1537
    %1539 = vmatprep.subr.mxu0 0.0
    %1540 = vmatpush1.msra.mxu0 0.0
    %1541 = vmatprep.subr.mxu0 0.0
    %1542 = vmatpush1.msra.mxu0 0.0
    %1543 = vmatprep.subr.mxu0 0.0
    %1544 = vmatpush1.msra.mxu0 0.0
    %1545 = vmatprep.subr.mxu0 0.0
    %1546 = vmatpush1.msra.mxu0 0.0
    %1547 = vmatprep.subr.mxu0 0.0
    %1548 = vmatpush1.msra.mxu0 0.0
    %1549 = vmatprep.subr.mxu0 0.0
    %1550 = vmatpush1.msra.mxu0 0.0
    %1551 = vmatprep.subr.mxu0 0.0
    %1552 = vmatpush1.msra.mxu0 0.0
    %1553 = vmatprep.subr.mxu0 0.0
    %1554 = vmatpush1.msra.mxu0 0.0
    %1555 = vmatprep.subr.mxu0 0.0
    %1556 = vmatpush1.msra.mxu0 0.0
    %1557 = vmatprep.subr.mxu0 0.0
    %1558 = vmatpush1.msra.mxu0 0.0
    %1559 = vmatprep.subr.mxu0 0.0
    %1560 = vmatpush1.msra.mxu0 0.0
    %1561 = vmatprep.subr.mxu0 0.0
    %1562 = vmatpush1.msra.mxu0 0.0
    %1563 = vmatprep.subr.mxu0 0.0
    %1564 = vmatpush1.msra.mxu0 0.0
    %1565 = vmatprep.subr.mxu0 0.0
    %1566 = vmatpush1.msra.mxu0 0.0
    %1567 = vmatprep.subr.mxu0 0.0
    %1568 = vmatpush1.msra.mxu0 0.0
    %1569 = vmatprep.subr.mxu0 0.0
    %1570 = vmatpush1.msra.mxu0 0.0
    %1571 = vmatprep.mubr.f32.mxu0 0.0
    %v1572 = vand.u32 %v1007, 4294901760
    %1573 = vmatmul.mubr.f32.gmra.mrb[0].mxu0 %v1572
    %v1574 = vpop.f32.mrb[0].mxu0
    %v1575 = vadd.f32 %v1456, %v1574
    %v1576 = vpop.f32.mrb[0].mxu0
    %1577 = vdwg.mxu0
    %1578 = vmatprep.subr.mxu0 0.0
    %v1579 = vand.u32 %v1008, 4294901760
    %1580 = vmatpush1.msra.mxu0 %v1579
    %1581 = vmatprep.subr.mxu0 0.0
    %v1582 = vand.u32 %v1009, 4294901760
    %1583 = vmatpush1.msra.mxu0 %v1582
    %1584 = vmatprep.subr.mxu0 0.0
    %v1585 = vand.u32 %v1010, 4294901760
    %1586 = vmatpush1.msra.mxu0 %v1585
    %1587 = vmatprep.subr.mxu0 0.0
    %v1588 = vand.u32 %v1011, 4294901760
    %1589 = vmatpush1.msra.mxu0 %v1588
    %1590 = vmatprep.subr.mxu0 0.0
    %v1591 = vand.u32 %v1012, 4294901760
    %1592 = vmatpush1.msra.mxu0 %v1591
    %1593 = vmatprep.subr.mxu0 0.0
    %v1594 = vand.u32 %v1013, 4294901760
    %1595 = vmatpush1.msra.mxu0 %v1594
    %1596 = vmatprep.subr.mxu0 0.0
    %v1597 = vand.u32 %v1014, 4294901760
    %1598 = vmatpush1.msra.mxu0 %v1597
    %1599 = vmatprep.subr.mxu0 0.0
    %v1600 = vand.u32 %v1015, 4294901760
    %1601 = vmatpush1.msra.mxu0 %v1600
    %1602 = vmatprep.subr.mxu0 0.0
    %v1603 = vand.u32 %v1016, 4294901760
    %1604 = vmatpush1.msra.mxu0 %v1603
    %1605 = vmatprep.subr.mxu0 0.0
    %v1606 = vand.u32 %v1017, 4294901760
    %1607 = vmatpush1.msra.mxu0 %v1606
    %1608 = vmatprep.subr.mxu0 0.0
    %v1609 = vand.u32 %v1018, 4294901760
    %1610 = vmatpush1.msra.mxu0 %v1609
    %1611 = vmatprep.subr.mxu0 0.0
    %v1612 = vand.u32 %v1019, 4294901760
    %1613 = vmatpush1.msra.mxu0 %v1612
    %1614 = vmatprep.subr.mxu0 0.0
    %v1615 = vand.u32 %v1020, 4294901760
    %1616 = vmatpush1.msra.mxu0 %v1615
    %1617 = vmatprep.subr.mxu0 0.0
    %v1618 = vand.u32 %v1021, 4294901760
    %1619 = vmatpush1.msra.mxu0 %v1618
    %1620 = vmatprep.subr.mxu0 0.0
    %v1621 = vand.u32 %v1022, 4294901760
    %1622 = vmatpush1.msra.mxu0 %v1621
    %1623 = vmatprep.subr.mxu0 0.0
    %v1624 = vand.u32 %v1023, 4294901760
    %1625 = vmatpush1.msra.mxu0 %v1624
    %1626 = vmatprep.subr.mxu0 0.0
    %1627 = vmatpush1.msra.mxu0 0.0
    %1628 = vmatprep.subr.mxu0 0.0
    %1629 = vmatpush1.msra.mxu0 0.0
    %1630 = vmatprep.subr.mxu0 0.0
    %1631 = vmatpush1.msra.mxu0 0.0
    %1632 = vmatprep.subr.mxu0 0.0
    %1633 = vmatpush1.msra.mxu0 0.0
    %1634 = vmatprep.subr.mxu0 0.0
    %1635 = vmatpush1.msra.mxu0 0.0
    %1636 = vmatprep.subr.mxu0 0.0
    %1637 = vmatpush1.msra.mxu0 0.0
    %1638 = vmatprep.subr.mxu0 0.0
    %1639 = vmatpush1.msra.mxu0 0.0
    %1640 = vmatprep.subr.mxu0 0.0
    %1641 = vmatpush1.msra.mxu0 0.0
    %1642 = vmatprep.subr.mxu0 0.0
    %1643 = vmatpush1.msra.mxu0 0.0
    %1644 = vmatprep.subr.mxu0 0.0
    %1645 = vmatpush1.msra.mxu0 0.0
    %1646 = vmatprep.subr.mxu0 0.0
    %1647 = vmatpush1.msra.mxu0 0.0
    %1648 = vmatprep.subr.mxu0 0.0
    %1649 = vmatpush1.msra.mxu0 0.0
    %1650 = vmatprep.subr.mxu0 0.0
    %1651 = vmatpush1.msra.mxu0 0.0
    %1652 = vmatprep.subr.mxu0 0.0
    %1653 = vmatpush1.msra.mxu0 0.0
    %1654 = vmatprep.subr.mxu0 0.0
    %1655 = vmatpush1.msra.mxu0 0.0
    %1656 = vmatprep.subr.mxu0 0.0
    %1657 = vmatpush1.msra.mxu0 0.0
    %1658 = vmatprep.mubr.f32.mxu0 0.0
    %v1659 = vand.u32 %v1007, 4294901760
    %1660 = vmatmul.mubr.f32.gmra.mrb[0].mxu0 %v1659
    %v1661 = vpop.f32.mrb[0].mxu0
    %v1662 = vadd.f32 %v1575, %v1661
    %v1663 = vpop.f32.mrb[0].mxu0
    %1664 = vdwg.mxu0
    %v1665 = vxor.u32 %v1662, 2147483648
    %v1666 = vmul.f32 %v1665, 1.442695
    %v1667 = vpow.pop %v1666
    %v1668 = vadd.f32 %v1667, 1.0
    %v1669 = vrcp.pop %v1668
    %v1670 = vmul.f32 1.0, %v1669
    %1671 = vst [vmem:[%s3] sm:$0xff] %v1670
    // Predicated region
    $region22: #{forward.1} parent=1 // pred_check
      _
    $region23: #{forward.1} parent=1 // pred_check_branch
      %1673 = sbr.rel (0) target = $region25
    $region24: #{forward.1} parent=1 // pred_region
      _
    $region25: #{forward.1} parent=1 // pred_fallthru
      _
    // Predicated region
    $region26: #{forward.1} parent=1 // pred_check
      _
    $region27: #{forward.1} parent=1 // pred_check_branch
      %1675 = sbr.rel (0) target = $region29
    $region28: #{forward.1} parent=1 // pred_region
      _
    $region29: #{forward.1} parent=1 // pred_fallthru
      _
    %1676 = vsyncpa [#allocation3], 1
    %1677 = vsyncpa [#allocation5], 1

</llo_original>
